<compile_context>
chip_gen: v7x
topology: tpu7x:2x2x1
jax: 0.10.0
libtpu: 0.0.40
codegen_flags: <defaults>
</compile_context>

<pallas_src>
import functools

import jax
import jax.numpy as jnp
import numpy as np
from jax.experimental import pallas as pl
from jax.experimental.pallas import tpu as pltpu


# ----------------------------------------------------------------------------
# Pallas kernel: streamed backward LSTM + forward cell at t=0 + 2 Linears
# ----------------------------------------------------------------------------
def bilstm_head_kernel(
    x_ref,    # (B, Tc, D) time chunk; chunks arrive in REVERSED time order
    wif_ref,  # (D, 4H)    forward  W_ih^T  (gate order i, f, g, o)
    bf_ref,   # (1, 4H)    forward  b_ih + b_hh
    wib_ref,  # (D, 4H)    backward W_ih^T
    whb_ref,  # (H, 4H)    backward W_hh^T
    bb_ref,   # (1, 4H)    backward b_ih + b_hh
    w1_ref,   # (2H, 128)  linear1 weight^T
    b1_ref,   # (1, 128)   linear1 bias
    w2_ref,   # (128, C)   linear2 weight^T
    b2_ref,   # (1, C)     linear2 bias
    out_ref,  # (B, C)     logits (written once, at the last grid step)
    hb_ref,   # (B, H) f32 scratch: backward hidden carry
    cb_ref,   # (B, H) f32 scratch: backward cell carry
):
    B, Tc, D = x_ref.shape
    H = whb_ref.shape[0]
    j = pl.program_id(0)
    last = pl.num_programs(0) - 1

    @pl.when(j == 0)
    def _init():
        hb_ref[...] = jnp.zeros(hb_ref.shape, hb_ref.dtype)
        cb_ref[...] = jnp.zeros(cb_ref.shape, cb_ref.dtype)

    def gate_split(g):
        # Lane-aligned slices when H % 128 == 0 (real model: H=256).
        i = jax.nn.sigmoid(g[:, 0 * H:1 * H])
        f = jax.nn.sigmoid(g[:, 1 * H:2 * H])
        gg = jnp.tanh(g[:, 2 * H:3 * H])
        o = jax.nn.sigmoid(g[:, 3 * H:4 * H])
        return i, f, gg, o

    # ---- Hoisted input projection for the whole chunk (bias folded in once).
    x_chunk = x_ref[...]                                   # (B, Tc, D)
    gates_in = (
        jnp.dot(
            x_chunk.reshape(B * Tc, D),
            wib_ref[...],
            preferred_element_type=jnp.float32,
        )
        + bb_ref[...]
    ).reshape(B, Tc, 4 * H)

    # ---- Backward recurrence over the chunk (reverse local time).  Only the
    #      small h @ W_hh matmul + gate elementwise sit on the serial path.
    h = hb_ref[...]
    c = cb_ref[...]
    wh = whb_ref[...]
    for s in range(Tc - 1, -1, -1):                        # short, fully unrolled
        g = gates_in[:, s, :] + jnp.dot(
            h.astype(wh.dtype), wh, preferred_element_type=jnp.float32
        )
        i_g, f_g, g_g, o_g = gate_split(g)
        c = f_g * c + i_g * g_g
        h = o_g * jnp.tanh(c)
    hb_ref[...] = h
    cb_ref[...] = c

    # ---- Last grid step holds global times [0, Tc-1]; after the loop, h is
    #      the backward hidden state at t=0 (lstm_output[:, 0, H:]).
    @pl.when(j == last)
    def _finalize():
        # Forward direction at t=0 = one cell step from zero state, so the
        # 0 @ W_hh_f term vanishes and W_hh_f is not needed at all.
        gf = (
            jnp.dot(x_ref[:, 0, :], wif_ref[...],
                    preferred_element_type=jnp.float32)
            + bf_ref[...]
        )
        i_f, f_f, g_f, o_f = gate_split(gf)
        cf = i_f * g_f
        hf = o_f * jnp.tanh(cf)                            # lstm_output[:, 0, :H]

        feat = jnp.concatenate([hf, h], axis=-1)           # (B, 2H)
        # dropout2 / dropout3 are identity at inference.
        hid = (
            jnp.dot(feat.astype(w1_ref.dtype), w1_ref[...],
                    preferred_element_type=jnp.float32)
            + b1_ref[...]
        )
        logits = (
            jnp.dot(hid.astype(w2_ref.dtype), w2_ref[...],
                    preferred_element_type=jnp.float32)
            + b2_ref[...]
        )
        out_ref[...] = logits.astype(out_ref.dtype)


# ----------------------------------------------------------------------------
# Wrapper
# ----------------------------------------------------------------------------
def _pick_time_chunk(S, max_chunk=32):
    """Largest divisor of S that is a multiple of 8 (or S itself), <= max_chunk."""
    for tc in range(min(max_chunk, S), 0, -1):
        if S % tc == 0 and (tc % 8 == 0 or tc == S):
            return tc
    return S


@functools.partial(jax.jit, static_argnames=("time_chunk", "compute_dtype"))
def bilstm_head(sequence_output, params, *, time_chunk=None,
                compute_dtype=jnp.float32):
    """sequence_output: (B, S, D) float32  ->  logits (B, classes)."""
    B, S, D = sequence_output.shape
    H = params["w_hh_b"].shape[1]
    C = params["w2"].shape[0]

    if time_chunk is None:
        time_chunk = _pick_time_chunk(S)
    assert S % time_chunk == 0, "sequence length must be divisible by time_chunk"
    n_chunks = S // time_chunk

    # No transpose of x: stream (B, Tc, D) chunks straight from the (B, S, D)
    # layout, reversed along time via the index_map.
    x = sequence_output.astype(compute_dtype)

    wif = params["w_ih_f"].T.astype(compute_dtype)                    # (D, 4H)
    bf = (params["b_ih_f"] + params["b_hh_f"]).astype(jnp.float32)[None, :]
    wib = params["w_ih_b"].T.astype(compute_dtype)                    # (D, 4H)
    whb = params["w_hh_b"].T.astype(compute_dtype)                    # (H, 4H)
    bb = (params["b_ih_b"] + params["b_hh_b"]).astype(jnp.float32)[None, :]
    w1 = params["w1"].T.astype(compute_dtype)                         # (2H, 128)
    b1 = params["b1"].astype(jnp.float32)[None, :]                    # (1, 128)
    w2 = params["w2"].T.astype(compute_dtype)                         # (128, C)
    b2 = params["b2"].astype(jnp.float32)[None, :]                    # (1, C)

    def const_spec(a):
        # Weight stays resident in VMEM: same block index every grid step.
        return pl.BlockSpec(a.shape, lambda j, _nd=a.ndim: (0,) * _nd)

    grid_spec = pltpu.PrefetchScalarGridSpec(
        num_scalar_prefetch=0,
        grid=(n_chunks,),
        in_specs=[
            # Reversed time-chunk stream (backward LSTM direction).
            pl.BlockSpec((B, time_chunk, D),
                         lambda j: (0, n_chunks - 1 - j, 0)),
            const_spec(wif), const_spec(bf),
            const_spec(wib), const_spec(whb), const_spec(bb),
            const_spec(w1), const_spec(b1),
            const_spec(w2), const_spec(b2),
        ],
        out_specs=pl.BlockSpec((B, C), lambda j: (0, 0)),
        scratch_shapes=[
            pltpu.VMEM((B, H), jnp.float32),   # backward h carry
            pltpu.VMEM((B, H), jnp.float32),   # backward c carry
        ],
    )

    return pl.pallas_call(
        bilstm_head_kernel,
        out_shape=jax.ShapeDtypeStruct((B, C), jnp.float32),
        grid_spec=grid_spec,
        compiler_params=pltpu.CompilerParams(
            dimension_semantics=("arbitrary",),      # serial recurrence over time
            vmem_limit_bytes=32 * 1024 * 1024,
        ),
    )(x, wif, bf, wib, whb, bb, w1, b1, w2, b2)


# ----------------------------------------------------------------------------
# Pure-JAX reference (mirrors PyTorch nn.LSTM(bidirectional) + Linear layers)
# ----------------------------------------------------------------------------
def _lstm_dir_ref(x, w_ih, w_hh, b_ih, b_hh, reverse):
    B, S, D = x.shape
    H = w_hh.shape[1]
    h = jnp.zeros((B, H), jnp.float32)
    c = jnp.zeros((B, H), jnp.float32)
    hs = []
    ts = range(S - 1, -1, -1) if reverse else range(S)
    for t in ts:
        gates = x[:, t, :] @ w_ih.T + b_ih + h @ w_hh.T + b_hh
        i = jax.nn.sigmoid(gates[:, 0 * H:1 * H])
        f = jax.nn.sigmoid(gates[:, 1 * H:2 * H])
        g = jnp.tanh(gates[:, 2 * H:3 * H])
        o = jax.nn.sigmoid(gates[:, 3 * H:4 * H])
        c = f * c + i * g
        h = o * jnp.tanh(c)
        hs.append(h)
    if reverse:
        hs = hs[::-1]
    return jnp.stack(hs, axis=1)  # (B, S, H)


def reference(sequence_output, params):
    hf = _lstm_dir_ref(sequence_output, params["w_ih_f"], params["w_hh_f"],
                       params["b_ih_f"], params["b_hh_f"], reverse=False)
    hb = _lstm_dir_ref(sequence_output, params["w_ih_b"], params["w_hh_b"],
                       params["b_ih_b"], params["b_hh_b"], reverse=True)
    lstm_out = jnp.concatenate([hf, hb], axis=-1)[:, 0, :]      # (B, 2H)
    h1 = lstm_out @ params["w1"].T + params["b1"]
    return h1 @ params["w2"].T + params["b2"]


# ----------------------------------------------------------------------------
# Deterministic parameter construction
# ----------------------------------------------------------------------------
def make_params(key, bert_hidden, lstm_hidden, classes):
    ks = jax.random.split(key, 12)
    s = 1.0 / np.sqrt(lstm_hidden)
    u = lambda k, shape, sc: jax.random.uniform(k, shape, jnp.float32, -sc, sc)
    return {
        "w_ih_f": u(ks[0], (4 * lstm_hidden, bert_hidden), s),
        "w_hh_f": u(ks[1], (4 * lstm_hidden, lstm_hidden), s),
        "b_ih_f": u(ks[2], (4 * lstm_hidden,), s),
        "b_hh_f": u(ks[3], (4 * lstm_hidden,), s),
        "w_ih_b": u(ks[4], (4 * lstm_hidden, bert_hidden), s),
        "w_hh_b": u(ks[5], (4 * lstm_hidden, lstm_hidden), s),
        "b_ih_b": u(ks[6], (4 * lstm_hidden,), s),
        "b_hh_b": u(ks[7], (4 * lstm_hidden,), s),
        "w1": u(ks[8], (128, 2 * lstm_hidden), 1.0 / np.sqrt(2 * lstm_hidden)),
        "b1": u(ks[9], (128,), 1.0 / np.sqrt(2 * lstm_hidden)),
        "w2": u(ks[10], (classes, 128), 1.0 / np.sqrt(128)),
        "b2": u(ks[11], (128,), 1.0 / np.sqrt(128))[:classes],
    }


if __name__ == "__main__":
    # Small shapes: batch=2, seq=16, bert_hidden=64, lstm_hidden=32, classes=3.
    B, S, D, H, CLASSES = 2, 16, 64, 32, 3
    key = jax.random.PRNGKey(0)
    k_x, k_p = jax.random.split(key)

    # Stand-in for bert(input_ids, attention_mask).last_hidden_state
    sequence_output = jax.random.normal(k_x, (B, S, D), jnp.float32)
    params = make_params(k_p, D, H, CLASSES)

    # time_chunk=8 -> grid of 2 reversed chunks (exercises the streamed carry).
    logits = bilstm_head(sequence_output, params, time_chunk=8)
    jax.block_until_ready(logits)

    ref = reference(sequence_output, params)
    np.testing.assert_allclose(np.asarray(logits), np.asarray(ref),
                               rtol=1e-5, atol=1e-5)

    print("KERNEL_OK")
</pallas_src>

<mosaic_0001>
module attributes {stable_mosaic.version = 11 : i64} {
  func.func @bilstm_head_kernel(%arg0: i32, %arg1: memref<2x8x64xf32, #tpu.memory_space<vmem>>, %arg2: memref<64x128xf32, #tpu.memory_space<vmem>>, %arg3: memref<1x128xf32, #tpu.memory_space<vmem>>, %arg4: memref<64x128xf32, #tpu.memory_space<vmem>>, %arg5: memref<32x128xf32, #tpu.memory_space<vmem>>, %arg6: memref<1x128xf32, #tpu.memory_space<vmem>>, %arg7: memref<64x128xf32, #tpu.memory_space<vmem>>, %arg8: memref<1x128xf32, #tpu.memory_space<vmem>>, %arg9: memref<128x3xf32, #tpu.memory_space<vmem>>, %arg10: memref<1x3xf32, #tpu.memory_space<vmem>>, %arg11: memref<2x3xf32, #tpu.memory_space<vmem>>, %arg12: memref<2x32xf32, #tpu.memory_space<vmem>>, %arg13: memref<2x32xf32, #tpu.memory_space<vmem>>) attributes {dimension_semantics = [#tpu.dimension_semantics<arbitrary>], iteration_bounds = array<i64: 2>, scalar_prefetch = 0 : i64, scratch_operands = 2 : i64, tpu.core_type = #tpu.core_type<tc>, window_params = [{transform_indices = @transform_0, window_bounds = array<i64: 2, 8, 64>}, {pipeline_mode = #tpu.pipeline_mode<synchronous>, transform_indices = @transform_1, window_bounds = array<i64: 64, 128>}, {pipeline_mode = #tpu.pipeline_mode<synchronous>, transform_indices = @transform_2, window_bounds = array<i64: 1, 128>}, {pipeline_mode = #tpu.pipeline_mode<synchronous>, transform_indices = @transform_3, window_bounds = array<i64: 64, 128>}, {pipeline_mode = #tpu.pipeline_mode<synchronous>, transform_indices = @transform_4, window_bounds = array<i64: 32, 128>}, {pipeline_mode = #tpu.pipeline_mode<synchronous>, transform_indices = @transform_5, window_bounds = array<i64: 1, 128>}, {pipeline_mode = #tpu.pipeline_mode<synchronous>, transform_indices = @transform_6, window_bounds = array<i64: 64, 128>}, {pipeline_mode = #tpu.pipeline_mode<synchronous>, transform_indices = @transform_7, window_bounds = array<i64: 1, 128>}, {pipeline_mode = #tpu.pipeline_mode<synchronous>, transform_indices = @transform_8, window_bounds = array<i64: 128, 3>}, {pipeline_mode = #tpu.pipeline_mode<synchronous>, transform_indices = @transform_9, window_bounds = array<i64: 1, 3>}, {pipeline_mode = #tpu.pipeline_mode<synchronous>, transform_indices = @transform_10, window_bounds = array<i64: 2, 3>}]} {
    %c0_i32 = arith.constant 0 : i32
    %0 = arith.cmpi eq, %arg0, %c0_i32 : i32
    %1 = arith.extui %0 : i1 to i32
    %c0_i32_0 = arith.constant 0 : i32
    %2 = arith.cmpi ne, %1, %c0_i32_0 : i32
    scf.if %2 {
      %cst_50 = arith.constant 0.000000e+00 : f32
      %251 = vector.broadcast %cst_50 : f32 to vector<2x32xf32>
      %c0_51 = arith.constant 0 : index
      %c0_52 = arith.constant 0 : index
      %252 = vector.load %arg12[%c0_51, %c0_52] : memref<2x32xf32, #tpu.memory_space<vmem>>, vector<2x32xf32>
      tpu.vector_store %arg12[%c0_51, %c0_52], %251 {strides = array<i32>} : memref<2x32xf32, #tpu.memory_space<vmem>>, vector<2x32xf32>,
      %cst_53 = arith.constant 0.000000e+00 : f32
      %253 = vector.broadcast %cst_53 : f32 to vector<2x32xf32>
      %c0_54 = arith.constant 0 : index
      %c0_55 = arith.constant 0 : index
      %254 = vector.load %arg13[%c0_54, %c0_55] : memref<2x32xf32, #tpu.memory_space<vmem>>, vector<2x32xf32>
      tpu.vector_store %arg13[%c0_54, %c0_55], %253 {strides = array<i32>} : memref<2x32xf32, #tpu.memory_space<vmem>>, vector<2x32xf32>,
    } else {
    }
    %c0 = arith.constant 0 : index
    %c0_1 = arith.constant 0 : index
    %c0_2 = arith.constant 0 : index
    %3 = vector.load %arg1[%c0, %c0_1, %c0_2] : memref<2x8x64xf32, #tpu.memory_space<vmem>>, vector<2x8x64xf32>
    %4 = vector.shape_cast %3 : vector<2x8x64xf32> to vector<16x64xf32>
    %c0_3 = arith.constant 0 : index
    %c0_4 = arith.constant 0 : index
    %5 = vector.load %arg4[%c0_3, %c0_4] : memref<64x128xf32, #tpu.memory_space<vmem>>, vector<64x128xf32>
    %cst = arith.constant dense<0.000000e+00> : vector<16x128xf32>
    %6 = tpu.matmul %4, %5, %cst {dimension_numbers = #tpu.dot_dimension_numbers<[1], [0], [0], [1], [0, 0, 1, 1], [], []>} : vector<16x64xf32>, vector<64x128xf32>, vector<16x128xf32> -> vector<16x128xf32>
    %c0_5 = arith.constant 0 : index
    %c0_6 = arith.constant 0 : index
    %7 = vector.load %arg6[%c0_5, %c0_6] : memref<1x128xf32, #tpu.memory_space<vmem>>, vector<1x128xf32>
    %8 = vector.broadcast %7 : vector<1x128xf32> to vector<16x128xf32>
    %9 = arith.addf %6, %8 : vector<16x128xf32>
    %10 = vector.shape_cast %9 : vector<16x128xf32> to vector<2x8x128xf32>
    %c0_7 = arith.constant 0 : index
    %c0_8 = arith.constant 0 : index
    %11 = vector.load %arg12[%c0_7, %c0_8] : memref<2x32xf32, #tpu.memory_space<vmem>>, vector<2x32xf32>
    %c0_9 = arith.constant 0 : index
    %c0_10 = arith.constant 0 : index
    %12 = vector.load %arg13[%c0_9, %c0_10] : memref<2x32xf32, #tpu.memory_space<vmem>>, vector<2x32xf32>
    %c0_11 = arith.constant 0 : index
    %c0_12 = arith.constant 0 : index
    %13 = vector.load %arg5[%c0_11, %c0_12] : memref<32x128xf32, #tpu.memory_space<vmem>>, vector<32x128xf32>
    %14 = vector.extract_strided_slice %10 {offsets = [0, 7, 0], sizes = [2, 1, 128], strides = [1, 1, 1]} : vector<2x8x128xf32> to vector<2x1x128xf32>
    %15 = vector.shape_cast %14 : vector<2x1x128xf32> to vector<2x128xf32>
    %cst_13 = arith.constant dense<0.000000e+00> : vector<2x128xf32>
    %16 = tpu.matmul %11, %13, %cst_13 {dimension_numbers = #tpu.dot_dimension_numbers<[1], [0], [0], [1], [0, 0, 1, 1], [], []>} : vector<2x32xf32>, vector<32x128xf32>, vector<2x128xf32> -> vector<2x128xf32>
    %17 = arith.addf %15, %16 : vector<2x128xf32>
    %18 = vector.extract_strided_slice %17 {offsets = [0, 0], sizes = [2, 32], strides = [1, 1]} : vector<2x128xf32> to vector<2x32xf32>
    %19 = arith.negf %18 : vector<2x32xf32>
    %20 = math.exp %19 : vector<2x32xf32>
    %cst_14 = arith.constant 1.000000e+00 : f32
    %21 = vector.broadcast %cst_14 : f32 to vector<2x32xf32>
    %22 = arith.addf %21, %20 : vector<2x32xf32>
    %23 = arith.divf %21, %22 : vector<2x32xf32>
    %24 = vector.extract_strided_slice %17 {offsets = [0, 32], sizes = [2, 32], strides = [1, 1]} : vector<2x128xf32> to vector<2x32xf32>
    %25 = arith.negf %24 : vector<2x32xf32>
    %26 = math.exp %25 : vector<2x32xf32>
    %cst_15 = arith.constant 1.000000e+00 : f32
    %27 = vector.broadcast %cst_15 : f32 to vector<2x32xf32>
    %28 = arith.addf %27, %26 : vector<2x32xf32>
    %29 = arith.divf %27, %28 : vector<2x32xf32>
    %30 = vector.extract_strided_slice %17 {offsets = [0, 64], sizes = [2, 32], strides = [1, 1]} : vector<2x128xf32> to vector<2x32xf32>
    %31 = math.tanh %30 : vector<2x32xf32>
    %32 = vector.extract_strided_slice %17 {offsets = [0, 96], sizes = [2, 32], strides = [1, 1]} : vector<2x128xf32> to vector<2x32xf32>
    %33 = arith.negf %32 : vector<2x32xf32>
    %34 = math.exp %33 : vector<2x32xf32>
    %cst_16 = arith.constant 1.000000e+00 : f32
    %35 = vector.broadcast %cst_16 : f32 to vector<2x32xf32>
    %36 = arith.addf %35, %34 : vector<2x32xf32>
    %37 = arith.divf %35, %36 : vector<2x32xf32>
    %38 = arith.mulf %29, %12 : vector<2x32xf32>
    %39 = arith.mulf %23, %31 : vector<2x32xf32>
    %40 = arith.addf %38, %39 : vector<2x32xf32>
    %41 = math.tanh %40 : vector<2x32xf32>
    %42 = arith.mulf %37, %41 : vector<2x32xf32>
    %43 = vector.extract_strided_slice %10 {offsets = [0, 6, 0], sizes = [2, 1, 128], strides = [1, 1, 1]} : vector<2x8x128xf32> to vector<2x1x128xf32>
    %44 = vector.shape_cast %43 : vector<2x1x128xf32> to vector<2x128xf32>
    %cst_17 = arith.constant dense<0.000000e+00> : vector<2x128xf32>
    %45 = tpu.matmul %42, %13, %cst_17 {dimension_numbers = #tpu.dot_dimension_numbers<[1], [0], [0], [1], [0, 0, 1, 1], [], []>} : vector<2x32xf32>, vector<32x128xf32>, vector<2x128xf32> -> vector<2x128xf32>
    %46 = arith.addf %44, %45 : vector<2x128xf32>
    %47 = vector.extract_strided_slice %46 {offsets = [0, 0], sizes = [2, 32], strides = [1, 1]} : vector<2x128xf32> to vector<2x32xf32>
    %48 = arith.negf %47 : vector<2x32xf32>
    %49 = math.exp %48 : vector<2x32xf32>
    %cst_18 = arith.constant 1.000000e+00 : f32
    %50 = vector.broadcast %cst_18 : f32 to vector<2x32xf32>
    %51 = arith.addf %50, %49 : vector<2x32xf32>
    %52 = arith.divf %50, %51 : vector<2x32xf32>
    %53 = vector.extract_strided_slice %46 {offsets = [0, 32], sizes = [2, 32], strides = [1, 1]} : vector<2x128xf32> to vector<2x32xf32>
    %54 = arith.negf %53 : vector<2x32xf32>
    %55 = math.exp %54 : vector<2x32xf32>
    %cst_19 = arith.constant 1.000000e+00 : f32
    %56 = vector.broadcast %cst_19 : f32 to vector<2x32xf32>
    %57 = arith.addf %56, %55 : vector<2x32xf32>
    %58 = arith.divf %56, %57 : vector<2x32xf32>
    %59 = vector.extract_strided_slice %46 {offsets = [0, 64], sizes = [2, 32], strides = [1, 1]} : vector<2x128xf32> to vector<2x32xf32>
    %60 = math.tanh %59 : vector<2x32xf32>
    %61 = vector.extract_strided_slice %46 {offsets = [0, 96], sizes = [2, 32], strides = [1, 1]} : vector<2x128xf32> to vector<2x32xf32>
    %62 = arith.negf %61 : vector<2x32xf32>
    %63 = math.exp %62 : vector<2x32xf32>
    %cst_20 = arith.constant 1.000000e+00 : f32
    %64 = vector.broadcast %cst_20 : f32 to vector<2x32xf32>
    %65 = arith.addf %64, %63 : vector<2x32xf32>
    %66 = arith.divf %64, %65 : vector<2x32xf32>
    %67 = arith.mulf %58, %40 : vector<2x32xf32>
    %68 = arith.mulf %52, %60 : vector<2x32xf32>
    %69 = arith.addf %67, %68 : vector<2x32xf32>
    %70 = math.tanh %69 : vector<2x32xf32>
    %71 = arith.mulf %66, %70 : vector<2x32xf32>
    %72 = vector.extract_strided_slice %10 {offsets = [0, 5, 0], sizes = [2, 1, 128], strides = [1, 1, 1]} : vector<2x8x128xf32> to vector<2x1x128xf32>
    %73 = vector.shape_cast %72 : vector<2x1x128xf32> to vector<2x128xf32>
    %cst_21 = arith.constant dense<0.000000e+00> : vector<2x128xf32>
    %74 = tpu.matmul %71, %13, %cst_21 {dimension_numbers = #tpu.dot_dimension_numbers<[1], [0], [0], [1], [0, 0, 1, 1], [], []>} : vector<2x32xf32>, vector<32x128xf32>, vector<2x128xf32> -> vector<2x128xf32>
    %75 = arith.addf %73, %74 : vector<2x128xf32>
    %76 = vector.extract_strided_slice %75 {offsets = [0, 0], sizes = [2, 32], strides = [1, 1]} : vector<2x128xf32> to vector<2x32xf32>
    %77 = arith.negf %76 : vector<2x32xf32>
    %78 = math.exp %77 : vector<2x32xf32>
    %cst_22 = arith.constant 1.000000e+00 : f32
    %79 = vector.broadcast %cst_22 : f32 to vector<2x32xf32>
    %80 = arith.addf %79, %78 : vector<2x32xf32>
    %81 = arith.divf %79, %80 : vector<2x32xf32>
    %82 = vector.extract_strided_slice %75 {offsets = [0, 32], sizes = [2, 32], strides = [1, 1]} : vector<2x128xf32> to vector<2x32xf32>
    %83 = arith.negf %82 : vector<2x32xf32>
    %84 = math.exp %83 : vector<2x32xf32>
    %cst_23 = arith.constant 1.000000e+00 : f32
    %85 = vector.broadcast %cst_23 : f32 to vector<2x32xf32>
    %86 = arith.addf %85, %84 : vector<2x32xf32>
    %87 = arith.divf %85, %86 : vector<2x32xf32>
    %88 = vector.extract_strided_slice %75 {offsets = [0, 64], sizes = [2, 32], strides = [1, 1]} : vector<2x128xf32> to vector<2x32xf32>
    %89 = math.tanh %88 : vector<2x32xf32>
    %90 = vector.extract_strided_slice %75 {offsets = [0, 96], sizes = [2, 32], strides = [1, 1]} : vector<2x128xf32> to vector<2x32xf32>
    %91 = arith.negf %90 : vector<2x32xf32>
    %92 = math.exp %91 : vector<2x32xf32>
    %cst_24 = arith.constant 1.000000e+00 : f32
    %93 = vector.broadcast %cst_24 : f32 to vector<2x32xf32>
    %94 = arith.addf %93, %92 : vector<2x32xf32>
    %95 = arith.divf %93, %94 : vector<2x32xf32>
    %96 = arith.mulf %87, %69 : vector<2x32xf32>
    %97 = arith.mulf %81, %89 : vector<2x32xf32>
    %98 = arith.addf %96, %97 : vector<2x32xf32>
    %99 = math.tanh %98 : vector<2x32xf32>
    %100 = arith.mulf %95, %99 : vector<2x32xf32>
    %101 = vector.extract_strided_slice %10 {offsets = [0, 4, 0], sizes = [2, 1, 128], strides = [1, 1, 1]} : vector<2x8x128xf32> to vector<2x1x128xf32>
    %102 = vector.shape_cast %101 : vector<2x1x128xf32> to vector<2x128xf32>
    %cst_25 = arith.constant dense<0.000000e+00> : vector<2x128xf32>
    %103 = tpu.matmul %100, %13, %cst_25 {dimension_numbers = #tpu.dot_dimension_numbers<[1], [0], [0], [1], [0, 0, 1, 1], [], []>} : vector<2x32xf32>, vector<32x128xf32>, vector<2x128xf32> -> vector<2x128xf32>
    %104 = arith.addf %102, %103 : vector<2x128xf32>
    %105 = vector.extract_strided_slice %104 {offsets = [0, 0], sizes = [2, 32], strides = [1, 1]} : vector<2x128xf32> to vector<2x32xf32>
    %106 = arith.negf %105 : vector<2x32xf32>
    %107 = math.exp %106 : vector<2x32xf32>
    %cst_26 = arith.constant 1.000000e+00 : f32
    %108 = vector.broadcast %cst_26 : f32 to vector<2x32xf32>
    %109 = arith.addf %108, %107 : vector<2x32xf32>
    %110 = arith.divf %108, %109 : vector<2x32xf32>
    %111 = vector.extract_strided_slice %104 {offsets = [0, 32], sizes = [2, 32], strides = [1, 1]} : vector<2x128xf32> to vector<2x32xf32>
    %112 = arith.negf %111 : vector<2x32xf32>
    %113 = math.exp %112 : vector<2x32xf32>
    %cst_27 = arith.constant 1.000000e+00 : f32
    %114 = vector.broadcast %cst_27 : f32 to vector<2x32xf32>
    %115 = arith.addf %114, %113 : vector<2x32xf32>
    %116 = arith.divf %114, %115 : vector<2x32xf32>
    %117 = vector.extract_strided_slice %104 {offsets = [0, 64], sizes = [2, 32], strides = [1, 1]} : vector<2x128xf32> to vector<2x32xf32>
    %118 = math.tanh %117 : vector<2x32xf32>
    %119 = vector.extract_strided_slice %104 {offsets = [0, 96], sizes = [2, 32], strides = [1, 1]} : vector<2x128xf32> to vector<2x32xf32>
    %120 = arith.negf %119 : vector<2x32xf32>
    %121 = math.exp %120 : vector<2x32xf32>
    %cst_28 = arith.constant 1.000000e+00 : f32
    %122 = vector.broadcast %cst_28 : f32 to vector<2x32xf32>
    %123 = arith.addf %122, %121 : vector<2x32xf32>
    %124 = arith.divf %122, %123 : vector<2x32xf32>
    %125 = arith.mulf %116, %98 : vector<2x32xf32>
    %126 = arith.mulf %110, %118 : vector<2x32xf32>
    %127 = arith.addf %125, %126 : vector<2x32xf32>
    %128 = math.tanh %127 : vector<2x32xf32>
    %129 = arith.mulf %124, %128 : vector<2x32xf32>
    %130 = vector.extract_strided_slice %10 {offsets = [0, 3, 0], sizes = [2, 1, 128], strides = [1, 1, 1]} : vector<2x8x128xf32> to vector<2x1x128xf32>
    %131 = vector.shape_cast %130 : vector<2x1x128xf32> to vector<2x128xf32>
    %cst_29 = arith.constant dense<0.000000e+00> : vector<2x128xf32>
    %132 = tpu.matmul %129, %13, %cst_29 {dimension_numbers = #tpu.dot_dimension_numbers<[1], [0], [0], [1], [0, 0, 1, 1], [], []>} : vector<2x32xf32>, vector<32x128xf32>, vector<2x128xf32> -> vector<2x128xf32>
    %133 = arith.addf %131, %132 : vector<2x128xf32>
    %134 = vector.extract_strided_slice %133 {offsets = [0, 0], sizes = [2, 32], strides = [1, 1]} : vector<2x128xf32> to vector<2x32xf32>
    %135 = arith.negf %134 : vector<2x32xf32>
    %136 = math.exp %135 : vector<2x32xf32>
    %cst_30 = arith.constant 1.000000e+00 : f32
    %137 = vector.broadcast %cst_30 : f32 to vector<2x32xf32>
    %138 = arith.addf %137, %136 : vector<2x32xf32>
    %139 = arith.divf %137, %138 : vector<2x32xf32>
    %140 = vector.extract_strided_slice %133 {offsets = [0, 32], sizes = [2, 32], strides = [1, 1]} : vector<2x128xf32> to vector<2x32xf32>
    %141 = arith.negf %140 : vector<2x32xf32>
    %142 = math.exp %141 : vector<2x32xf32>
    %cst_31 = arith.constant 1.000000e+00 : f32
    %143 = vector.broadcast %cst_31 : f32 to vector<2x32xf32>
    %144 = arith.addf %143, %142 : vector<2x32xf32>
    %145 = arith.divf %143, %144 : vector<2x32xf32>
    %146 = vector.extract_strided_slice %133 {offsets = [0, 64], sizes = [2, 32], strides = [1, 1]} : vector<2x128xf32> to vector<2x32xf32>
    %147 = math.tanh %146 : vector<2x32xf32>
    %148 = vector.extract_strided_slice %133 {offsets = [0, 96], sizes = [2, 32], strides = [1, 1]} : vector<2x128xf32> to vector<2x32xf32>
    %149 = arith.negf %148 : vector<2x32xf32>
    %150 = math.exp %149 : vector<2x32xf32>
    %cst_32 = arith.constant 1.000000e+00 : f32
    %151 = vector.broadcast %cst_32 : f32 to vector<2x32xf32>
    %152 = arith.addf %151, %150 : vector<2x32xf32>
    %153 = arith.divf %151, %152 : vector<2x32xf32>
    %154 = arith.mulf %145, %127 : vector<2x32xf32>
    %155 = arith.mulf %139, %147 : vector<2x32xf32>
    %156 = arith.addf %154, %155 : vector<2x32xf32>
    %157 = math.tanh %156 : vector<2x32xf32>
    %158 = arith.mulf %153, %157 : vector<2x32xf32>
    %159 = vector.extract_strided_slice %10 {offsets = [0, 2, 0], sizes = [2, 1, 128], strides = [1, 1, 1]} : vector<2x8x128xf32> to vector<2x1x128xf32>
    %160 = vector.shape_cast %159 : vector<2x1x128xf32> to vector<2x128xf32>
    %cst_33 = arith.constant dense<0.000000e+00> : vector<2x128xf32>
    %161 = tpu.matmul %158, %13, %cst_33 {dimension_numbers = #tpu.dot_dimension_numbers<[1], [0], [0], [1], [0, 0, 1, 1], [], []>} : vector<2x32xf32>, vector<32x128xf32>, vector<2x128xf32> -> vector<2x128xf32>
    %162 = arith.addf %160, %161 : vector<2x128xf32>
    %163 = vector.extract_strided_slice %162 {offsets = [0, 0], sizes = [2, 32], strides = [1, 1]} : vector<2x128xf32> to vector<2x32xf32>
    %164 = arith.negf %163 : vector<2x32xf32>
    %165 = math.exp %164 : vector<2x32xf32>
    %cst_34 = arith.constant 1.000000e+00 : f32
    %166 = vector.broadcast %cst_34 : f32 to vector<2x32xf32>
    %167 = arith.addf %166, %165 : vector<2x32xf32>
    %168 = arith.divf %166, %167 : vector<2x32xf32>
    %169 = vector.extract_strided_slice %162 {offsets = [0, 32], sizes = [2, 32], strides = [1, 1]} : vector<2x128xf32> to vector<2x32xf32>
    %170 = arith.negf %169 : vector<2x32xf32>
    %171 = math.exp %170 : vector<2x32xf32>
    %cst_35 = arith.constant 1.000000e+00 : f32
    %172 = vector.broadcast %cst_35 : f32 to vector<2x32xf32>
    %173 = arith.addf %172, %171 : vector<2x32xf32>
    %174 = arith.divf %172, %173 : vector<2x32xf32>
    %175 = vector.extract_strided_slice %162 {offsets = [0, 64], sizes = [2, 32], strides = [1, 1]} : vector<2x128xf32> to vector<2x32xf32>
    %176 = math.tanh %175 : vector<2x32xf32>
    %177 = vector.extract_strided_slice %162 {offsets = [0, 96], sizes = [2, 32], strides = [1, 1]} : vector<2x128xf32> to vector<2x32xf32>
    %178 = arith.negf %177 : vector<2x32xf32>
    %179 = math.exp %178 : vector<2x32xf32>
    %cst_36 = arith.constant 1.000000e+00 : f32
    %180 = vector.broadcast %cst_36 : f32 to vector<2x32xf32>
    %181 = arith.addf %180, %179 : vector<2x32xf32>
    %182 = arith.divf %180, %181 : vector<2x32xf32>
    %183 = arith.mulf %174, %156 : vector<2x32xf32>
    %184 = arith.mulf %168, %176 : vector<2x32xf32>
    %185 = arith.addf %183, %184 : vector<2x32xf32>
    %186 = math.tanh %185 : vector<2x32xf32>
    %187 = arith.mulf %182, %186 : vector<2x32xf32>
    %188 = vector.extract_strided_slice %10 {offsets = [0, 1, 0], sizes = [2, 1, 128], strides = [1, 1, 1]} : vector<2x8x128xf32> to vector<2x1x128xf32>
    %189 = vector.shape_cast %188 : vector<2x1x128xf32> to vector<2x128xf32>
    %cst_37 = arith.constant dense<0.000000e+00> : vector<2x128xf32>
    %190 = tpu.matmul %187, %13, %cst_37 {dimension_numbers = #tpu.dot_dimension_numbers<[1], [0], [0], [1], [0, 0, 1, 1], [], []>} : vector<2x32xf32>, vector<32x128xf32>, vector<2x128xf32> -> vector<2x128xf32>
    %191 = arith.addf %189, %190 : vector<2x128xf32>
    %192 = vector.extract_strided_slice %191 {offsets = [0, 0], sizes = [2, 32], strides = [1, 1]} : vector<2x128xf32> to vector<2x32xf32>
    %193 = arith.negf %192 : vector<2x32xf32>
    %194 = math.exp %193 : vector<2x32xf32>
    %cst_38 = arith.constant 1.000000e+00 : f32
    %195 = vector.broadcast %cst_38 : f32 to vector<2x32xf32>
    %196 = arith.addf %195, %194 : vector<2x32xf32>
    %197 = arith.divf %195, %196 : vector<2x32xf32>
    %198 = vector.extract_strided_slice %191 {offsets = [0, 32], sizes = [2, 32], strides = [1, 1]} : vector<2x128xf32> to vector<2x32xf32>
    %199 = arith.negf %198 : vector<2x32xf32>
    %200 = math.exp %199 : vector<2x32xf32>
    %cst_39 = arith.constant 1.000000e+00 : f32
    %201 = vector.broadcast %cst_39 : f32 to vector<2x32xf32>
    %202 = arith.addf %201, %200 : vector<2x32xf32>
    %203 = arith.divf %201, %202 : vector<2x32xf32>
    %204 = vector.extract_strided_slice %191 {offsets = [0, 64], sizes = [2, 32], strides = [1, 1]} : vector<2x128xf32> to vector<2x32xf32>
    %205 = math.tanh %204 : vector<2x32xf32>
    %206 = vector.extract_strided_slice %191 {offsets = [0, 96], sizes = [2, 32], strides = [1, 1]} : vector<2x128xf32> to vector<2x32xf32>
    %207 = arith.negf %206 : vector<2x32xf32>
    %208 = math.exp %207 : vector<2x32xf32>
    %cst_40 = arith.constant 1.000000e+00 : f32
    %209 = vector.broadcast %cst_40 : f32 to vector<2x32xf32>
    %210 = arith.addf %209, %208 : vector<2x32xf32>
    %211 = arith.divf %209, %210 : vector<2x32xf32>
    %212 = arith.mulf %203, %185 : vector<2x32xf32>
    %213 = arith.mulf %197, %205 : vector<2x32xf32>
    %214 = arith.addf %212, %213 : vector<2x32xf32>
    %215 = math.tanh %214 : vector<2x32xf32>
    %216 = arith.mulf %211, %215 : vector<2x32xf32>
    %217 = vector.extract_strided_slice %10 {offsets = [0, 0, 0], sizes = [2, 1, 128], strides = [1, 1, 1]} : vector<2x8x128xf32> to vector<2x1x128xf32>
    %218 = vector.shape_cast %217 : vector<2x1x128xf32> to vector<2x128xf32>
    %cst_41 = arith.constant dense<0.000000e+00> : vector<2x128xf32>
    %219 = tpu.matmul %216, %13, %cst_41 {dimension_numbers = #tpu.dot_dimension_numbers<[1], [0], [0], [1], [0, 0, 1, 1], [], []>} : vector<2x32xf32>, vector<32x128xf32>, vector<2x128xf32> -> vector<2x128xf32>
    %220 = arith.addf %218, %219 : vector<2x128xf32>
    %221 = vector.extract_strided_slice %220 {offsets = [0, 0], sizes = [2, 32], strides = [1, 1]} : vector<2x128xf32> to vector<2x32xf32>
    %222 = arith.negf %221 : vector<2x32xf32>
    %223 = math.exp %222 : vector<2x32xf32>
    %cst_42 = arith.constant 1.000000e+00 : f32
    %224 = vector.broadcast %cst_42 : f32 to vector<2x32xf32>
    %225 = arith.addf %224, %223 : vector<2x32xf32>
    %226 = arith.divf %224, %225 : vector<2x32xf32>
    %227 = vector.extract_strided_slice %220 {offsets = [0, 32], sizes = [2, 32], strides = [1, 1]} : vector<2x128xf32> to vector<2x32xf32>
    %228 = arith.negf %227 : vector<2x32xf32>
    %229 = math.exp %228 : vector<2x32xf32>
    %cst_43 = arith.constant 1.000000e+00 : f32
    %230 = vector.broadcast %cst_43 : f32 to vector<2x32xf32>
    %231 = arith.addf %230, %229 : vector<2x32xf32>
    %232 = arith.divf %230, %231 : vector<2x32xf32>
    %233 = vector.extract_strided_slice %220 {offsets = [0, 64], sizes = [2, 32], strides = [1, 1]} : vector<2x128xf32> to vector<2x32xf32>
    %234 = math.tanh %233 : vector<2x32xf32>
    %235 = vector.extract_strided_slice %220 {offsets = [0, 96], sizes = [2, 32], strides = [1, 1]} : vector<2x128xf32> to vector<2x32xf32>
    %236 = arith.negf %235 : vector<2x32xf32>
    %237 = math.exp %236 : vector<2x32xf32>
    %cst_44 = arith.constant 1.000000e+00 : f32
    %238 = vector.broadcast %cst_44 : f32 to vector<2x32xf32>
    %239 = arith.addf %238, %237 : vector<2x32xf32>
    %240 = arith.divf %238, %239 : vector<2x32xf32>
    %241 = arith.mulf %232, %214 : vector<2x32xf32>
    %242 = arith.mulf %226, %234 : vector<2x32xf32>
    %243 = arith.addf %241, %242 : vector<2x32xf32>
    %244 = math.tanh %243 : vector<2x32xf32>
    %245 = arith.mulf %240, %244 : vector<2x32xf32>
    %c0_45 = arith.constant 0 : index
    %c0_46 = arith.constant 0 : index
    %246 = vector.load %arg12[%c0_45, %c0_46] : memref<2x32xf32, #tpu.memory_space<vmem>>, vector<2x32xf32>
    tpu.vector_store %arg12[%c0_45, %c0_46], %245 {strides = array<i32>} : memref<2x32xf32, #tpu.memory_space<vmem>>, vector<2x32xf32>,
    %c0_47 = arith.constant 0 : index
    %c0_48 = arith.constant 0 : index
    %247 = vector.load %arg13[%c0_47, %c0_48] : memref<2x32xf32, #tpu.memory_space<vmem>>, vector<2x32xf32>
    tpu.vector_store %arg13[%c0_47, %c0_48], %243 {strides = array<i32>} : memref<2x32xf32, #tpu.memory_space<vmem>>, vector<2x32xf32>,
    %c1_i32 = arith.constant 1 : i32
    %248 = arith.cmpi eq, %arg0, %c1_i32 : i32
    %249 = arith.extui %248 : i1 to i32
    %c0_i32_49 = arith.constant 0 : i32
    %250 = arith.cmpi ne, %249, %c0_i32_49 : i32
    scf.if %250 {
      %c0_50 = arith.constant 0 : index
      %c0_51 = arith.constant 0 : index
      %c0_52 = arith.constant 0 : index
      %251 = vector.load %arg1[%c0_50, %c0_51, %c0_52] : memref<2x8x64xf32, #tpu.memory_space<vmem>>, vector<2x1x64xf32>
      %252 = vector.shape_cast %251 : vector<2x1x64xf32> to vector<2x64xf32>
      %c0_53 = arith.constant 0 : index
      %c0_54 = arith.constant 0 : index
      %253 = vector.load %arg2[%c0_53, %c0_54] : memref<64x128xf32, #tpu.memory_space<vmem>>, vector<64x128xf32>
      %cst_55 = arith.constant dense<0.000000e+00> : vector<2x128xf32>
      %254 = tpu.matmul %252, %253, %cst_55 {dimension_numbers = #tpu.dot_dimension_numbers<[1], [0], [0], [1], [0, 0, 1, 1], [], []>} : vector<2x64xf32>, vector<64x128xf32>, vector<2x128xf32> -> vector<2x128xf32>
      %c0_56 = arith.constant 0 : index
      %c0_57 = arith.constant 0 : index
      %255 = vector.load %arg3[%c0_56, %c0_57] : memref<1x128xf32, #tpu.memory_space<vmem>>, vector<1x128xf32>
      %256 = vector.broadcast %255 : vector<1x128xf32> to vector<2x128xf32>
      %257 = arith.addf %254, %256 : vector<2x128xf32>
      %258 = vector.extract_strided_slice %257 {offsets = [0, 0], sizes = [2, 32], strides = [1, 1]} : vector<2x128xf32> to vector<2x32xf32>
      %259 = arith.negf %258 : vector<2x32xf32>
      %260 = math.exp %259 : vector<2x32xf32>
      %cst_58 = arith.constant 1.000000e+00 : f32
      %261 = vector.broadcast %cst_58 : f32 to vector<2x32xf32>
      %262 = arith.addf %261, %260 : vector<2x32xf32>
      %263 = arith.divf %261, %262 : vector<2x32xf32>
      %264 = vector.extract_strided_slice %257 {offsets = [0, 64], sizes = [2, 32], strides = [1, 1]} : vector<2x128xf32> to vector<2x32xf32>
      %265 = math.tanh %264 : vector<2x32xf32>
      %266 = vector.extract_strided_slice %257 {offsets = [0, 96], sizes = [2, 32], strides = [1, 1]} : vector<2x128xf32> to vector<2x32xf32>
      %267 = arith.negf %266 : vector<2x32xf32>
      %268 = math.exp %267 : vector<2x32xf32>
      %cst_59 = arith.constant 1.000000e+00 : f32
      %269 = vector.broadcast %cst_59 : f32 to vector<2x32xf32>
      %270 = arith.addf %269, %268 : vector<2x32xf32>
      %271 = arith.divf %269, %270 : vector<2x32xf32>
      %272 = arith.mulf %263, %265 : vector<2x32xf32>
      %273 = math.tanh %272 : vector<2x32xf32>
      %274 = arith.mulf %271, %273 : vector<2x32xf32>
      %275 = tpu.concatenate %274, %245 in 1 : vector<2x32xf32>, vector<2x32xf32> -> vector<2x64xf32>
      %c0_60 = arith.constant 0 : index
      %c0_61 = arith.constant 0 : index
      %276 = vector.load %arg7[%c0_60, %c0_61] : memref<64x128xf32, #tpu.memory_space<vmem>>, vector<64x128xf32>
      %cst_62 = arith.constant dense<0.000000e+00> : vector<2x128xf32>
      %277 = tpu.matmul %275, %276, %cst_62 {dimension_numbers = #tpu.dot_dimension_numbers<[1], [0], [0], [1], [0, 0, 1, 1], [], []>} : vector<2x64xf32>, vector<64x128xf32>, vector<2x128xf32> -> vector<2x128xf32>
      %c0_63 = arith.constant 0 : index
      %c0_64 = arith.constant 0 : index
      %278 = vector.load %arg8[%c0_63, %c0_64] : memref<1x128xf32, #tpu.memory_space<vmem>>, vector<1x128xf32>
      %279 = vector.broadcast %278 : vector<1x128xf32> to vector<2x128xf32>
      %280 = arith.addf %277, %279 : vector<2x128xf32>
      %c0_65 = arith.constant 0 : index
      %c0_66 = arith.constant 0 : index
      %281 = vector.load %arg9[%c0_65, %c0_66] : memref<128x3xf32, #tpu.memory_space<vmem>>, vector<128x3xf32>
      %cst_67 = arith.constant dense<0.000000e+00> : vector<2x3xf32>
      %282 = tpu.matmul %280, %281, %cst_67 {dimension_numbers = #tpu.dot_dimension_numbers<[1], [0], [0], [1], [0, 0, 1, 1], [], []>} : vector<2x128xf32>, vector<128x3xf32>, vector<2x3xf32> -> vector<2x3xf32>
      %c0_68 = arith.constant 0 : index
      %c0_69 = arith.constant 0 : index
      %283 = vector.load %arg10[%c0_68, %c0_69] : memref<1x3xf32, #tpu.memory_space<vmem>>, vector<1x3xf32>
      %284 = vector.broadcast %283 : vector<1x3xf32> to vector<2x3xf32>
      %285 = arith.addf %282, %284 : vector<2x3xf32>
      %c0_70 = arith.constant 0 : index
      %c0_71 = arith.constant 0 : index
      %286 = vector.load %arg11[%c0_70, %c0_71] : memref<2x3xf32, #tpu.memory_space<vmem>>, vector<2x3xf32>
      tpu.vector_store %arg11[%c0_70, %c0_71], %285 {strides = array<i32>} : memref<2x3xf32, #tpu.memory_space<vmem>>, vector<2x3xf32>,
    } else {
    }
    return
  }
  func.func @transform_0(%arg0: i32) -> (i32, i32, i32) {
    %c1_i32 = arith.constant 1 : i32
    %0 = arith.subi %c1_i32, %arg0 : i32
    %c0_i32 = arith.constant 0 : i32
    %c0_i32_0 = arith.constant 0 : i32
    %c0_i32_1 = arith.constant 0 : i32
    return %c0_i32, %0, %c0_i32_0 : i32, i32, i32
  }
  func.func @transform_1(%arg0: i32) -> (i32, i32) {
    %c0_i32 = arith.constant 0 : i32
    %c0_i32_0 = arith.constant 0 : i32
    %c0_i32_1 = arith.constant 0 : i32
    return %c0_i32, %c0_i32_0 : i32, i32
  }
  func.func @transform_2(%arg0: i32) -> (i32, i32) {
    %c0_i32 = arith.constant 0 : i32
    %c0_i32_0 = arith.constant 0 : i32
    %c0_i32_1 = arith.constant 0 : i32
    return %c0_i32, %c0_i32_0 : i32, i32
  }
  func.func @transform_3(%arg0: i32) -> (i32, i32) {
    %c0_i32 = arith.constant 0 : i32
    %c0_i32_0 = arith.constant 0 : i32
    %c0_i32_1 = arith.constant 0 : i32
    return %c0_i32, %c0_i32_0 : i32, i32
  }
  func.func @transform_4(%arg0: i32) -> (i32, i32) {
    %c0_i32 = arith.constant 0 : i32
    %c0_i32_0 = arith.constant 0 : i32
    %c0_i32_1 = arith.constant 0 : i32
    return %c0_i32, %c0_i32_0 : i32, i32
  }
  func.func @transform_5(%arg0: i32) -> (i32, i32) {
    %c0_i32 = arith.constant 0 : i32
    %c0_i32_0 = arith.constant 0 : i32
    %c0_i32_1 = arith.constant 0 : i32
    return %c0_i32, %c0_i32_0 : i32, i32
  }
  func.func @transform_6(%arg0: i32) -> (i32, i32) {
    %c0_i32 = arith.constant 0 : i32
    %c0_i32_0 = arith.constant 0 : i32
    %c0_i32_1 = arith.constant 0 : i32
    return %c0_i32, %c0_i32_0 : i32, i32
  }
  func.func @transform_7(%arg0: i32) -> (i32, i32) {
    %c0_i32 = arith.constant 0 : i32
    %c0_i32_0 = arith.constant 0 : i32
    %c0_i32_1 = arith.constant 0 : i32
    return %c0_i32, %c0_i32_0 : i32, i32
  }
  func.func @transform_8(%arg0: i32) -> (i32, i32) {
    %c0_i32 = arith.constant 0 : i32
    %c0_i32_0 = arith.constant 0 : i32
    %c0_i32_1 = arith.constant 0 : i32
    return %c0_i32, %c0_i32_0 : i32, i32
  }
  func.func @transform_9(%arg0: i32) -> (i32, i32) {
    %c0_i32 = arith.constant 0 : i32
    %c0_i32_0 = arith.constant 0 : i32
    %c0_i32_1 = arith.constant 0 : i32
    return %c0_i32, %c0_i32_0 : i32, i32
  }
  func.func @transform_10(%arg0: i32) -> (i32, i32) {
    %c0_i32 = arith.constant 0 : i32
    %c0_i32_0 = arith.constant 0 : i32
    %c0_i32_1 = arith.constant 0 : i32
    return %c0_i32, %c0_i32_0 : i32, i32
  }
}

</mosaic_0001>

<llo_original>
// kernel: bilstm_head.1
$region0: #{bilstm_head.1}
  #allocation0 [shape = 'u32[]', space=smem, size = 0x4, offset = 0x4, fixed_abs, tag = 'smem constant byte address 0x4 - core index']
  #allocation1 [shape = 'u32[144,128]{1,0:T(1,128)}', space=vmem, size = 0x12000, scoped, tag = 'internal scratch']
  #allocation2 [shape = 'f32[2,32]{1,0:T(2,128)}', space=vmem, size = 0x400, scoped, tag = 'scratch operand']
  #allocation3 [shape = 'f32[2,32]{1,0:T(2,128)}', space=vmem, size = 0x400, scoped, tag = 'scratch operand']
  %s0 = inlined_call_operand.hbm [shape: f32[2,16,64], index: 0, kind: input, shape index: {}]
  %s1 = inlined_call_operand.vmem [shape: f32[64,128], index: 1, kind: input, shape index: {}]
  %s2 = inlined_call_operand.vmem [shape: f32[1,128], index: 2, kind: input, shape index: {}]
  %s3 = inlined_call_operand.vmem [shape: f32[64,128], index: 3, kind: input, shape index: {}]
  %s4 = inlined_call_operand.hbm [shape: f32[32,128], index: 4, kind: input, shape index: {}]
  %s5 = inlined_call_operand.vmem [shape: f32[1,128], index: 5, kind: input, shape index: {}]
  %s6 = inlined_call_operand.vmem [shape: f32[64,128], index: 6, kind: input, shape index: {}]
  %s7 = inlined_call_operand.vmem [shape: f32[1,128], index: 7, kind: input, shape index: {}]
  %s8 = inlined_call_operand.vmem [shape: f32[128,3], index: 8, kind: input, shape index: {}]
  %s9 = inlined_call_operand.vmem [shape: f32[1,3], index: 9, kind: input, shape index: {}]
  %s10 = inlined_call_operand.hbm [shape: f32[2,3], index: 10, kind: output, shape index: {}]
  %s11 = sld [smem:[#allocation0]]
  $region89: #{bilstm_head.1} parent=0
    _
  %s13 = ssub.s32 1, %s11
  %s14 = scalar_select 0, %s13, %s11
  $region1: #{bilstm_head.1} parent=0
    #allocation4 [shape = 'u8[16384]{0}', space=vmem, size = 0x4000, scoped, tag = 'input window, operand 0']
    #allocation5 [shape = 's32[2]{0}', space=sflag, size = 0x8, scoped, tag = 'scoped memory for bilstm_head.1']
    #allocation6 [shape = 's32[2]{0}', space=sflag, size = 0x8, scoped, tag = 'scoped memory for bilstm_head.1']
    #allocation7 [shape = 'u8[16384]{0}', space=vmem, size = 0x4000, scoped, tag = 'input window, operand 4, single buffered']
    #allocation8 [shape = 's32[1]{0}', space=sflag, size = 0x4, scoped, tag = 'scoped memory for bilstm_head.1']
    #allocation9 [shape = 'u8[1024]{0}', space=vmem, size = 0x400, scoped, tag = 'output window, operand 0, single buffered']
    %15 = vsyncpa [#allocation5], 0
    %s16 = scalar_lea.sflag [#allocation5], 1
    %17 = vsyncpa %s16, 0
    %18 = vsyncpa [#allocation8], 0
    %19 = vsyncpa [#allocation6], 0
    loop: start=0, step=1, limit=4
    $region2: #{bilstm_head.1} parent=1 // loop_pre_header
      _
    $region3: #{bilstm_head.1} parent=1 // loop_header
      %s21 = sphi 0, %s25
      %p22 = scmp.ge.s32.totalorder %s21, 4
      %s33 = sphi 0, %s35
      %s36 = sphi 0, %s33
      %s37 = sphi 0, %s36
      %s53 = sphi 0, %s37
      %s57 = sphi 0, %s57
      %s59 = sphi 0, %s57
      %s60 = sphi 0, %s59
      %s74 = sphi 0, %s60
      %s78 = sphi 0, %s78
      %s80 = sphi 0, %s78
      %s81 = sphi 0, %s80
      %s95 = sphi 0, %s81
      %s99 = sphi 0, %s99
      %s101 = sphi 0, %s99
      %s102 = sphi 0, %s101
      %s116 = sphi 0, %s102
      %s120 = sphi 0, %s120
      %s122 = sphi 0, %s120
      %s123 = sphi 0, %s122
      %s137 = sphi 0, %s123
      %s141 = sphi 0, %s141
      %s143 = sphi 0, %s141
      %s144 = sphi 0, %s143
      %s158 = sphi 0, %s144
      %s162 = sphi 0, %s162
      %s164 = sphi 0, %s162
      %s165 = sphi 0, %s164
      %s179 = sphi 0, %s165
      %s183 = sphi 0, %s183
      %s185 = sphi 0, %s183
      %s186 = sphi 0, %s185
      %s200 = sphi 0, %s186
      %s204 = sphi 0, %s204
      %s206 = sphi 0, %s204
      %s207 = sphi 0, %s206
      %s221 = sphi 0, %s207
      %s225 = sphi 0, %s225
      %s227 = sphi 0, %s225
      %s228 = sphi 0, %s227
      %s242 = sphi 0, %s228
      %s246 = sphi 0, %s246
      %s248 = sphi 0, %s246
      %s249 = sphi 0, %s248
      %s263 = sphi 0, %s249
    $region4: #{bilstm_head.1} parent=1 // loop_header_branch
      %24 = sbr.rel (%p22) target = $region8
    $region5: #{bilstm_head.1} parent=1 // loop_body
      %s26 = ssub.s32 %s21, 1
      %s27 = ssub.s32 %s21, 2
      %s28 = sadd.s32 %s21, 1
      %s29 = ssub.s32 1, %s21
      %s30 = ssub.s32 1, %s28
      %s31 = ssub.s32 %s29, %s30
      %p32 = scmp.eq.s32.totalorder %s31, 0
      %s34 = sadd.s32 %s33, 1
      %s35 = scalar_select %p32, %s33, %s34
      %p38 = pneg %p32
      %p39 = scmp.eq.s32.totalorder %s21, 1
      %p40 = por %p38, %p39
      %p41 = scmp.ne.s32.totalorder %s33, %s36
      %p42 = scmp.eq.s32.totalorder %s21, 0
      %p43 = por %p41, %p42
      %p44 = scmp.ne.s32.totalorder %s33, %s36
      %p45 = scmp.eq.s32.totalorder %s26, 1
      %p46 = por %p44, %p45
      %p47 = scmp.ne.s32.totalorder %s36, %s37
      %p48 = scmp.eq.s32.totalorder %s26, 0
      %p49 = por %p47, %p48
      %p50 = scmp.ne.s32.totalorder %s36, %s37
      %p51 = scmp.eq.s32.totalorder %s27, 1
      %p52 = por %p50, %p51
      %p54 = scmp.ne.s32.totalorder %s37, %s53
      %p55 = scmp.eq.s32.totalorder %s27, 0
      %p56 = por %p54, %p55
      %s58 = sadd.s32 %s57, 1
      %p61 = scmp.eq.s32.totalorder %s21, 1
      %p62 = scmp.ne.s32.totalorder %s57, %s59
      %p63 = scmp.eq.s32.totalorder %s21, 0
      %p64 = por %p62, %p63
      %p65 = scmp.ne.s32.totalorder %s57, %s59
      %p66 = scmp.eq.s32.totalorder %s26, 1
      %p67 = por %p65, %p66
      %p68 = scmp.ne.s32.totalorder %s59, %s60
      %p69 = scmp.eq.s32.totalorder %s26, 0
      %p70 = por %p68, %p69
      %p71 = scmp.ne.s32.totalorder %s59, %s60
      %p72 = scmp.eq.s32.totalorder %s27, 1
      %p73 = por %p71, %p72
      %p75 = scmp.ne.s32.totalorder %s60, %s74
      %p76 = scmp.eq.s32.totalorder %s27, 0
      %p77 = por %p75, %p76
      %s79 = sadd.s32 %s78, 1
      %p82 = scmp.eq.s32.totalorder %s21, 1
      %p83 = scmp.ne.s32.totalorder %s78, %s80
      %p84 = scmp.eq.s32.totalorder %s21, 0
      %p85 = por %p83, %p84
      %p86 = scmp.ne.s32.totalorder %s78, %s80
      %p87 = scmp.eq.s32.totalorder %s26, 1
      %p88 = por %p86, %p87
      %p89 = scmp.ne.s32.totalorder %s80, %s81
      %p90 = scmp.eq.s32.totalorder %s26, 0
      %p91 = por %p89, %p90
      %p92 = scmp.ne.s32.totalorder %s80, %s81
      %p93 = scmp.eq.s32.totalorder %s27, 1
      %p94 = por %p92, %p93
      %p96 = scmp.ne.s32.totalorder %s81, %s95
      %p97 = scmp.eq.s32.totalorder %s27, 0
      %p98 = por %p96, %p97
      %s100 = sadd.s32 %s99, 1
      %p103 = scmp.eq.s32.totalorder %s21, 1
      %p104 = scmp.ne.s32.totalorder %s99, %s101
      %p105 = scmp.eq.s32.totalorder %s21, 0
      %p106 = por %p104, %p105
      %p107 = scmp.ne.s32.totalorder %s99, %s101
      %p108 = scmp.eq.s32.totalorder %s26, 1
      %p109 = por %p107, %p108
      %p110 = scmp.ne.s32.totalorder %s101, %s102
      %p111 = scmp.eq.s32.totalorder %s26, 0
      %p112 = por %p110, %p111
      %p113 = scmp.ne.s32.totalorder %s101, %s102
      %p114 = scmp.eq.s32.totalorder %s27, 1
      %p115 = por %p113, %p114
      %p117 = scmp.ne.s32.totalorder %s102, %s116
      %p118 = scmp.eq.s32.totalorder %s27, 0
      %p119 = por %p117, %p118
      %s121 = sadd.s32 %s120, 1
      %p124 = scmp.eq.s32.totalorder %s21, 1
      %p125 = scmp.ne.s32.totalorder %s120, %s122
      %p126 = scmp.eq.s32.totalorder %s21, 0
      %p127 = por %p125, %p126
      %p128 = scmp.ne.s32.totalorder %s120, %s122
      %p129 = scmp.eq.s32.totalorder %s26, 1
      %p130 = por %p128, %p129
      %p131 = scmp.ne.s32.totalorder %s122, %s123
      %p132 = scmp.eq.s32.totalorder %s26, 0
      %p133 = por %p131, %p132
      %p134 = scmp.ne.s32.totalorder %s122, %s123
      %p135 = scmp.eq.s32.totalorder %s27, 1
      %p136 = por %p134, %p135
      %p138 = scmp.ne.s32.totalorder %s123, %s137
      %p139 = scmp.eq.s32.totalorder %s27, 0
      %p140 = por %p138, %p139
      %s142 = sadd.s32 %s141, 1
      %p145 = scmp.eq.s32.totalorder %s21, 1
      %p146 = scmp.ne.s32.totalorder %s141, %s143
      %p147 = scmp.eq.s32.totalorder %s21, 0
      %p148 = por %p146, %p147
      %p149 = scmp.ne.s32.totalorder %s141, %s143
      %p150 = scmp.eq.s32.totalorder %s26, 1
      %p151 = por %p149, %p150
      %p152 = scmp.ne.s32.totalorder %s143, %s144
      %p153 = scmp.eq.s32.totalorder %s26, 0
      %p154 = por %p152, %p153
      %p155 = scmp.ne.s32.totalorder %s143, %s144
      %p156 = scmp.eq.s32.totalorder %s27, 1
      %p157 = por %p155, %p156
      %p159 = scmp.ne.s32.totalorder %s144, %s158
      %p160 = scmp.eq.s32.totalorder %s27, 0
      %p161 = por %p159, %p160
      %s163 = sadd.s32 %s162, 1
      %p166 = scmp.eq.s32.totalorder %s21, 1
      %p167 = scmp.ne.s32.totalorder %s162, %s164
      %p168 = scmp.eq.s32.totalorder %s21, 0
      %p169 = por %p167, %p168
      %p170 = scmp.ne.s32.totalorder %s162, %s164
      %p171 = scmp.eq.s32.totalorder %s26, 1
      %p172 = por %p170, %p171
      %p173 = scmp.ne.s32.totalorder %s164, %s165
      %p174 = scmp.eq.s32.totalorder %s26, 0
      %p175 = por %p173, %p174
      %p176 = scmp.ne.s32.totalorder %s164, %s165
      %p177 = scmp.eq.s32.totalorder %s27, 1
      %p178 = por %p176, %p177
      %p180 = scmp.ne.s32.totalorder %s165, %s179
      %p181 = scmp.eq.s32.totalorder %s27, 0
      %p182 = por %p180, %p181
      %s184 = sadd.s32 %s183, 1
      %p187 = scmp.eq.s32.totalorder %s21, 1
      %p188 = scmp.ne.s32.totalorder %s183, %s185
      %p189 = scmp.eq.s32.totalorder %s21, 0
      %p190 = por %p188, %p189
      %p191 = scmp.ne.s32.totalorder %s183, %s185
      %p192 = scmp.eq.s32.totalorder %s26, 1
      %p193 = por %p191, %p192
      %p194 = scmp.ne.s32.totalorder %s185, %s186
      %p195 = scmp.eq.s32.totalorder %s26, 0
      %p196 = por %p194, %p195
      %p197 = scmp.ne.s32.totalorder %s185, %s186
      %p198 = scmp.eq.s32.totalorder %s27, 1
      %p199 = por %p197, %p198
      %p201 = scmp.ne.s32.totalorder %s186, %s200
      %p202 = scmp.eq.s32.totalorder %s27, 0
      %p203 = por %p201, %p202
      %s205 = sadd.s32 %s204, 1
      %p208 = scmp.eq.s32.totalorder %s21, 1
      %p209 = scmp.ne.s32.totalorder %s204, %s206
      %p210 = scmp.eq.s32.totalorder %s21, 0
      %p211 = por %p209, %p210
      %p212 = scmp.ne.s32.totalorder %s204, %s206
      %p213 = scmp.eq.s32.totalorder %s26, 1
      %p214 = por %p212, %p213
      %p215 = scmp.ne.s32.totalorder %s206, %s207
      %p216 = scmp.eq.s32.totalorder %s26, 0
      %p217 = por %p215, %p216
      %p218 = scmp.ne.s32.totalorder %s206, %s207
      %p219 = scmp.eq.s32.totalorder %s27, 1
      %p220 = por %p218, %p219
      %p222 = scmp.ne.s32.totalorder %s207, %s221
      %p223 = scmp.eq.s32.totalorder %s27, 0
      %p224 = por %p222, %p223
      %s226 = sadd.s32 %s225, 1
      %p229 = scmp.eq.s32.totalorder %s21, 1
      %p230 = scmp.ne.s32.totalorder %s225, %s227
      %p231 = scmp.eq.s32.totalorder %s21, 0
      %p232 = por %p230, %p231
      %p233 = scmp.ne.s32.totalorder %s225, %s227
      %p234 = scmp.eq.s32.totalorder %s26, 1
      %p235 = por %p233, %p234
      %p236 = scmp.ne.s32.totalorder %s227, %s228
      %p237 = scmp.eq.s32.totalorder %s26, 0
      %p238 = por %p236, %p237
      %p239 = scmp.ne.s32.totalorder %s227, %s228
      %p240 = scmp.eq.s32.totalorder %s27, 1
      %p241 = por %p239, %p240
      %p243 = scmp.ne.s32.totalorder %s228, %s242
      %p244 = scmp.eq.s32.totalorder %s27, 0
      %p245 = por %p243, %p244
      %s247 = sadd.s32 %s246, 1
      %p250 = scmp.eq.s32.totalorder %s21, 1
      %p251 = scmp.ne.s32.totalorder %s246, %s248
      %p252 = scmp.eq.s32.totalorder %s21, 0
      %p253 = por %p251, %p252
      %p254 = scmp.ne.s32.totalorder %s246, %s248
      %p255 = scmp.eq.s32.totalorder %s26, 1
      %p256 = por %p254, %p255
      %p257 = scmp.ne.s32.totalorder %s248, %s249
      %p258 = scmp.eq.s32.totalorder %s26, 0
      %p259 = por %p257, %p258
      %p260 = scmp.ne.s32.totalorder %s248, %s249
      %p261 = scmp.eq.s32.totalorder %s27, 1
      %p262 = por %p260, %p261
      %p264 = scmp.ne.s32.totalorder %s249, %s263
      %p265 = scmp.eq.s32.totalorder %s27, 0
      %p266 = por %p264, %p265
      %p267 = scmp.le.s32.totalorder 1, %s21
      %p268 = scmp.lt.s32.totalorder %s21, 3
      %p269 = pnand %p267, %p268
      %p270 = pneg %p269
      // Predicated region
      $region9: #{bilstm_head.1} parent=5 // pred_check
        _
      $region10: #{bilstm_head.1} parent=5 // pred_check_branch
        %272 = sbr.rel (%p269) target = $region12
      $region11: #{bilstm_head.1} parent=5 // pred_region
        %s273 = ssub.s32 %s21, 1
        // Predicated region
        $region13: #{bilstm_head.1} parent=11 // pred_check
          %p274 = pneg %p70
        $region14: #{bilstm_head.1} parent=11 // pred_check_branch
          %276 = sbr.rel (%p274) target = $region16
        $region15: #{bilstm_head.1} parent=11 // pred_region
          _
        $region16: #{bilstm_head.1} parent=11 // pred_fallthru
          _
        // Predicated region
        $region17: #{bilstm_head.1} parent=11 // pred_check
          %p277 = pneg %p91
        $region18: #{bilstm_head.1} parent=11 // pred_check_branch
          %279 = sbr.rel (%p277) target = $region20
        $region19: #{bilstm_head.1} parent=11 // pred_region
          _
        $region20: #{bilstm_head.1} parent=11 // pred_fallthru
          _
        // Predicated region
        $region21: #{bilstm_head.1} parent=11 // pred_check
          %p280 = pneg %p112
        $region22: #{bilstm_head.1} parent=11 // pred_check_branch
          %282 = sbr.rel (%p280) target = $region24
        $region23: #{bilstm_head.1} parent=11 // pred_region
          _
        $region24: #{bilstm_head.1} parent=11 // pred_fallthru
          _
        // Predicated region
        $region25: #{bilstm_head.1} parent=11 // pred_check
          %p283 = pneg %p133
        $region26: #{bilstm_head.1} parent=11 // pred_check_branch
          %285 = sbr.rel (%p283) target = $region28
        $region27: #{bilstm_head.1} parent=11 // pred_region
          %s287 = ssub.s32 512, 512
          %288 = vsyncadd [#allocation8], %s287
          %s289 = sshll.u32 [#allocation7], 4
          %s290 = int_to_ptr.vmem [resolvable:$true] %s289
          %295 = dma.hbm_to_vmem [thread:$0]  %s4, 512, %s290, [#allocation8], 128, 128, 8
        $region28: #{bilstm_head.1} parent=11 // pred_fallthru
          _
        // Predicated region
        $region29: #{bilstm_head.1} parent=11 // pred_check
          %p296 = pneg %p154
        $region30: #{bilstm_head.1} parent=11 // pred_check_branch
          %298 = sbr.rel (%p296) target = $region32
        $region31: #{bilstm_head.1} parent=11 // pred_region
          _
        $region32: #{bilstm_head.1} parent=11 // pred_fallthru
          _
        // Predicated region
        $region33: #{bilstm_head.1} parent=11 // pred_check
          %p299 = pneg %p175
        $region34: #{bilstm_head.1} parent=11 // pred_check_branch
          %301 = sbr.rel (%p299) target = $region36
        $region35: #{bilstm_head.1} parent=11 // pred_region
          _
        $region36: #{bilstm_head.1} parent=11 // pred_fallthru
          _
        // Predicated region
        $region37: #{bilstm_head.1} parent=11 // pred_check
          %p302 = pneg %p196
        $region38: #{bilstm_head.1} parent=11 // pred_check_branch
          %304 = sbr.rel (%p302) target = $region40
        $region39: #{bilstm_head.1} parent=11 // pred_region
          _
        $region40: #{bilstm_head.1} parent=11 // pred_fallthru
          _
        // Predicated region
        $region41: #{bilstm_head.1} parent=11 // pred_check
          %p305 = pneg %p217
        $region42: #{bilstm_head.1} parent=11 // pred_check_branch
          %307 = sbr.rel (%p305) target = $region44
        $region43: #{bilstm_head.1} parent=11 // pred_region
          _
        $region44: #{bilstm_head.1} parent=11 // pred_fallthru
          _
        // Predicated region
        $region45: #{bilstm_head.1} parent=11 // pred_check
          %p308 = pneg %p238
        $region46: #{bilstm_head.1} parent=11 // pred_check_branch
          %310 = sbr.rel (%p308) target = $region48
        $region47: #{bilstm_head.1} parent=11 // pred_region
          _
        $region48: #{bilstm_head.1} parent=11 // pred_fallthru
          _
      $region12: #{bilstm_head.1} parent=5 // pred_fallthru
        _
      %p311 = scmp.lt.s32.totalorder %s21, 2
      // Predicated region
      $region49: #{bilstm_head.1} parent=5 // pred_check
        %p312 = pneg %p311
      $region50: #{bilstm_head.1} parent=5 // pred_check_branch
        %314 = sbr.rel (%p312) target = $region52
      $region51: #{bilstm_head.1} parent=5 // pred_region
        // Predicated region
        $region53: #{bilstm_head.1} parent=51 // pred_check
          %p315 = pneg %p43
        $region54: #{bilstm_head.1} parent=51 // pred_check_branch
          %317 = sbr.rel (%p315) target = $region56
        $region55: #{bilstm_head.1} parent=51 // pred_region
          %s318 = sand.u32 %s33, 1
          %s319 = scalar_lea.sflag [#allocation5], %s318
          %s320 = sand.u32 %s33, 1
          %s321 = smul.addr %s320, 16
          %s322 = scalar_lea.vmem [#allocation4], %s321
          %s323 = ssub.s32 1, %s21
          %s325 = ssub.s32 256, 256
          %326 = vsyncadd %s319, %s325
          %s327 = smul.addr %s323, 128
          %s328 = scalar_lea.hbm %s0, %s327
          %s329 = sshll.u32 %s322, 4
          %s330 = int_to_ptr.vmem [resolvable:$true] %s329
          %335 = dma.hbm_to_vmem [thread:$0]  %s328, 256, %s330, %s319, 256, 128, 8
        $region56: #{bilstm_head.1} parent=51 // pred_fallthru
          _
      $region52: #{bilstm_head.1} parent=5 // pred_fallthru
        _
      %p336 = scmp.le.s32.totalorder 1, %s21
      %p337 = scmp.lt.s32.totalorder %s21, 3
      %p338 = pnand %p336, %p337
      %p339 = pneg %p338
      // Predicated region
      $region57: #{bilstm_head.1} parent=5 // pred_check
        _
      $region58: #{bilstm_head.1} parent=5 // pred_check_branch
        %341 = sbr.rel (%p338) target = $region60
      $region59: #{bilstm_head.1} parent=5 // pred_region
        %s342 = ssub.s32 %s21, 1
        %s343 = sand.u32 %s36, 1
        %s344 = scalar_lea.sflag [#allocation5], %s343
        %s345 = sand.u32 %s36, 1
        %s346 = smul.addr %s345, 16
        %s347 = scalar_lea.vmem [#allocation4], %s346
        // Predicated region
        $region61: #{bilstm_head.1} parent=59 // pred_check
          %p348 = pneg %p49
        $region62: #{bilstm_head.1} parent=59 // pred_check_branch
          %350 = sbr.rel (%p348) target = $region64
        $region63: #{bilstm_head.1} parent=59 // pred_region
          %351 = dma.done %s344, 256
        $region64: #{bilstm_head.1} parent=59 // pred_fallthru
          _
        // Predicated region
        $region65: #{bilstm_head.1} parent=59 // pred_check
          %p352 = pneg %p133
        $region66: #{bilstm_head.1} parent=59 // pred_check_branch
          %354 = sbr.rel (%p352) target = $region68
        $region67: #{bilstm_head.1} parent=59 // pred_region
          %355 = dma.done [#allocation8], 512
        $region68: #{bilstm_head.1} parent=59 // pred_fallthru
          _
        %s356 = sand.u32 %s36, 1
        %s357 = scalar_lea.sflag [#allocation5], %s356
        %s358 = sand.u32 %s36, 1
        %s359 = smul.addr %s358, 16
        %s360 = scalar_lea.vmem [#allocation4], %s359
        %p361 = pneg %p49
        %p362 = pneg %p46
        %p363 = pneg %p70
        %p364 = pneg %p67
        %p365 = pneg %p91
        %p366 = pneg %p88
        %p367 = pneg %p112
        %p368 = pneg %p109
        %p369 = pneg %p133
        %p370 = pneg %p130
        %p371 = pneg %p154
        %p372 = pneg %p151
        %p373 = pneg %p175
        %p374 = pneg %p172
        %p375 = pneg %p196
        %p376 = pneg %p193
        %p377 = pneg %p217
        %p378 = pneg %p214
        %p379 = pneg %p238
        %p380 = pneg %p235
        %p381 = pneg %p259
        %p382 = pneg %p256
        %s383 = ssub.s32 1, %s26
        %p384 = scmp.eq.s32.totalorder %s26, 0
        // Predicated region
        $region69: #{bilstm_head.1} parent=59 // pred_check
          %p385 = pneg %p384
        $region70: #{bilstm_head.1} parent=59 // pred_check_branch
          %387 = sbr.rel (%p385) target = $region72
        $region71: #{bilstm_head.1} parent=59 // pred_region
          %vm388 = vcmask 254976
          %389 = vst.msk [vmem:[#allocation2] sm:$0x3] %vm388, 0.0
          %390 = vst.msk [vmem:[#allocation3] sm:$0x3] %vm388, 0.0
        $region72: #{bilstm_head.1} parent=59 // pred_fallthru
          _
        %v391 = vld [vmem:[%s347] sm:$0xff]
        %v392 = vld [vmem:[%s347 + $0x8] sm:$0xff]
        %v393 = vld [vmem:[%s3] sm:$0xff]
        %v394 = vld [vmem:[%s3 + $0x8] sm:$0xff]
        %v395 = vld [vmem:[%s3 + $0x10] sm:$0xff]
        %v396 = vld [vmem:[%s3 + $0x18] sm:$0xff]
        %v397 = vld [vmem:[%s3 + $0x20] sm:$0xff]
        %v398 = vld [vmem:[%s3 + $0x28] sm:$0xff]
        %v399 = vld [vmem:[%s3 + $0x30] sm:$0xff]
        %v400 = vld [vmem:[%s3 + $0x38] sm:$0xff]
        %v401 = vld [vmem:[%s5] sm:$0x1]
        %v403 = vlaneseq
        %v404 = vshrl.u32 %v403, 7
        %v405 = vsub.s32 0, %v404
        %v406 = vrot.slane %v401, %v405
        %vm408 = vcmask 523264
        %v410 = vsel %vm408, %v391, 0
        %v413 = vsel %vm408, %v392, 0
        %415 = vmatprep.subr.mxu0 0.0
        %416 = vmatpush1.msra.mxu0 %v393
        %417 = vmatprep.subr.mxu0 0.0
        %418 = vmatpush1.msra.mxu0 %v394
        %419 = vmatprep.subr.mxu0 0.0
        %420 = vmatpush1.msra.mxu0 %v395
        %421 = vmatprep.subr.mxu0 0.0
        %422 = vmatpush1.msra.mxu0 %v396
        %423 = vmatprep.subr.mxu0 0.0
        %424 = vmatpush1.msra.mxu0 %v397
        %425 = vmatprep.subr.mxu0 0.0
        %426 = vmatpush1.msra.mxu0 %v398
        %427 = vmatprep.subr.mxu0 0.0
        %428 = vmatpush1.msra.mxu0 %v399
        %429 = vmatprep.subr.mxu0 0.0
        %430 = vmatpush1.msra.mxu0 %v400
        %431 = vmatprep.subr.mxu0 0.0
        %432 = vmatpush1.msra.mxu0 0.0
        %433 = vmatprep.subr.mxu0 0.0
        %434 = vmatpush1.msra.mxu0 0.0
        %435 = vmatprep.subr.mxu0 0.0
        %436 = vmatpush1.msra.mxu0 0.0
        %437 = vmatprep.subr.mxu0 0.0
        %438 = vmatpush1.msra.mxu0 0.0
        %439 = vmatprep.subr.mxu0 0.0
        %440 = vmatpush1.msra.mxu0 0.0
        %441 = vmatprep.subr.mxu0 0.0
        %442 = vmatpush1.msra.mxu0 0.0
        %443 = vmatprep.subr.mxu0 0.0
        %444 = vmatpush1.msra.mxu0 0.0
        %445 = vmatprep.subr.mxu0 0.0
        %446 = vmatpush1.msra.mxu0 0.0
        %447 = vmatprep.subr.mxu0 0.0
        %448 = vmatpush1.msra.mxu0 0.0
        %449 = vmatprep.subr.mxu0 0.0
        %450 = vmatpush1.msra.mxu0 0.0
        %451 = vmatprep.subr.mxu0 0.0
        %452 = vmatpush1.msra.mxu0 0.0
        %453 = vmatprep.subr.mxu0 0.0
        %454 = vmatpush1.msra.mxu0 0.0
        %455 = vmatprep.subr.mxu0 0.0
        %456 = vmatpush1.msra.mxu0 0.0
        %457 = vmatprep.subr.mxu0 0.0
        %458 = vmatpush1.msra.mxu0 0.0
        %459 = vmatprep.subr.mxu0 0.0
        %460 = vmatpush1.msra.mxu0 0.0
        %461 = vmatprep.subr.mxu0 0.0
        %462 = vmatpush1.msra.mxu0 0.0
        %463 = vmatprep.subr.mxu0 0.0
        %464 = vmatpush1.msra.mxu0 0.0
        %465 = vmatprep.subr.mxu0 0.0
        %466 = vmatpush1.msra.mxu0 0.0
        %467 = vmatprep.subr.mxu0 0.0
        %468 = vmatpush1.msra.mxu0 0.0
        %469 = vmatprep.subr.mxu0 0.0
        %470 = vmatpush1.msra.mxu0 0.0
        %471 = vmatprep.subr.mxu0 0.0
        %472 = vmatpush1.msra.mxu0 0.0
        %473 = vmatprep.subr.mxu0 0.0
        %474 = vmatpush1.msra.mxu0 0.0
        %475 = vmatprep.subr.mxu0 0.0
        %476 = vmatpush1.msra.mxu0 0.0
        %477 = vmatprep.subr.mxu0 0.0
        %478 = vmatpush1.msra.mxu0 0.0
        %479 = vmatprep.mubr.f32.mxu0 0.0
        %480 = vmatmul.mubr.f32.gmra.mrb[0].mxu0 %v410
        %v481 = vpop.f32.mrb[0].mxu0
        %v482 = vadd.f32 %v406, %v481
        %v483 = vpop.f32.mrb[0].mxu0
        %484 = vmatprep.mubr.f32.mxu0 0.0
        %485 = vmatmul.mubr.f32.gmra.mrb[0].mxu0 %v413
        %v486 = vpop.f32.mrb[0].mxu0
        %v487 = vadd.f32 %v406, %v486
        %v488 = vpop.f32.mrb[0].mxu0
        %489 = vdwg.mxu0
        %v490 = vld [vmem:[#allocation2] sm:$0x3]
        %v491 = vld [vmem:[#allocation3] sm:$0x3]
        %v492 = vld [vmem:[#allocation7] sm:$0xff]
        %v493 = vld [vmem:[#allocation7 + $0x8] sm:$0xff]
        %v494 = vld [vmem:[#allocation7 + $0x10] sm:$0xff]
        %v495 = vld [vmem:[#allocation7 + $0x18] sm:$0xff]
        %vm496 = vcmask 261120
        %v498 = vsel %vm496, %v490, 0
        %500 = vmatprep.subr.mxu0 0.0
        %501 = vmatpush1.msra.mxu0 %v492
        %502 = vmatprep.subr.mxu0 0.0
        %503 = vmatpush1.msra.mxu0 %v493
        %504 = vmatprep.subr.mxu0 0.0
        %505 = vmatpush1.msra.mxu0 %v494
        %506 = vmatprep.subr.mxu0 0.0
        %507 = vmatpush1.msra.mxu0 %v495
        %508 = vmatprep.subr.mxu0 0.0
        %509 = vmatpush1.msra.mxu0 0.0
        %510 = vmatprep.subr.mxu0 0.0
        %511 = vmatpush1.msra.mxu0 0.0
        %512 = vmatprep.subr.mxu0 0.0
        %513 = vmatpush1.msra.mxu0 0.0
        %514 = vmatprep.subr.mxu0 0.0
        %515 = vmatpush1.msra.mxu0 0.0
        %516 = vmatprep.subr.mxu0 0.0
        %517 = vmatpush1.msra.mxu0 0.0
        %518 = vmatprep.subr.mxu0 0.0
        %519 = vmatpush1.msra.mxu0 0.0
        %520 = vmatprep.subr.mxu0 0.0
        %521 = vmatpush1.msra.mxu0 0.0
        %522 = vmatprep.subr.mxu0 0.0
        %523 = vmatpush1.msra.mxu0 0.0
        %524 = vmatprep.subr.mxu0 0.0
        %525 = vmatpush1.msra.mxu0 0.0
        %526 = vmatprep.subr.mxu0 0.0
        %527 = vmatpush1.msra.mxu0 0.0
        %528 = vmatprep.subr.mxu0 0.0
        %529 = vmatpush1.msra.mxu0 0.0
        %530 = vmatprep.subr.mxu0 0.0
        %531 = vmatpush1.msra.mxu0 0.0
        %532 = vmatprep.subr.mxu0 0.0
        %533 = vmatpush1.msra.mxu0 0.0
        %534 = vmatprep.subr.mxu0 0.0
        %535 = vmatpush1.msra.mxu0 0.0
        %536 = vmatprep.subr.mxu0 0.0
        %537 = vmatpush1.msra.mxu0 0.0
        %538 = vmatprep.subr.mxu0 0.0
        %539 = vmatpush1.msra.mxu0 0.0
        %540 = vmatprep.subr.mxu0 0.0
        %541 = vmatpush1.msra.mxu0 0.0
        %542 = vmatprep.subr.mxu0 0.0
        %543 = vmatpush1.msra.mxu0 0.0
        %544 = vmatprep.subr.mxu0 0.0
        %545 = vmatpush1.msra.mxu0 0.0
        %546 = vmatprep.subr.mxu0 0.0
        %547 = vmatpush1.msra.mxu0 0.0
        %548 = vmatprep.subr.mxu0 0.0
        %549 = vmatpush1.msra.mxu0 0.0
        %550 = vmatprep.subr.mxu0 0.0
        %551 = vmatpush1.msra.mxu0 0.0
        %552 = vmatprep.subr.mxu0 0.0
        %553 = vmatpush1.msra.mxu0 0.0
        %554 = vmatprep.subr.mxu0 0.0
        %555 = vmatpush1.msra.mxu0 0.0
        %556 = vmatprep.subr.mxu0 0.0
        %557 = vmatpush1.msra.mxu0 0.0
        %558 = vmatprep.subr.mxu0 0.0
        %559 = vmatpush1.msra.mxu0 0.0
        %560 = vmatprep.subr.mxu0 0.0
        %561 = vmatpush1.msra.mxu0 0.0
        %562 = vmatprep.subr.mxu0 0.0
        %563 = vmatpush1.msra.mxu0 0.0
        %564 = vmatprep.mubr.f32.mxu0 0.0
        %565 = vmatmul.mubr.f32.gmra.mrb[0].mxu0 %v498
        %v566 = vpop.f32.mrb[0].mxu0
        %v567 = vadd.f32 0.0, %v566
        %v568 = vpop.f32.mrb[0].mxu0
        %569 = vdwg.mxu0
        %v571 = vrot.slane %v567, 1
        %v572 = vrot.slane %v567, 2
        %v575 = vadd.f32 %v482, %v571
        %v576 = vadd.f32 %v487, %v572
        %v577 = vxor.u32 %v575, 2147483648
        %v578 = vxor.u32 %v576, 2147483648
        %v579 = vmul.f32 %v577, 1.442695
        %v580 = vpow.pop %v579
        %v581 = vmul.f32 %v578, 1.442695
        %v582 = vpow.pop %v581
        %v583 = vadd.f32 %v580, 1.0
        %v584 = vadd.f32 %v582, 1.0
        %v585 = vrcp.pop %v583
        %v586 = vmul.f32 1.0, %v585
        %v587 = vrcp.pop %v584
        %v588 = vmul.f32 1.0, %v587
        %v589 = vtanh.pop %v575
        %v590 = vtanh.pop %v576
        %v592 = vrot.slane %v491, 1
        %v593 = vrot.slane %v491, 2
        %594 = vrot.lane.b32.xlu0 %v592, 32
        %v595 = vpop.permute.xlu0 %594
        %596 = vrot.lane.b32.xlu0 %v593, 32
        %v597 = vpop.permute.xlu0 %596
        %v600 = vmul.f32 %v586, %v595
        %v601 = vmul.f32 %v588, %v597
        %604 = vrot.lane.b32.xlu0 %v589, 64
        %v605 = vpop.permute.xlu0 %604
        %606 = vrot.lane.b32.xlu0 %v590, 64
        %v607 = vpop.permute.xlu0 %606
        %v610 = vmul.f32 %v586, %v605
        %v611 = vmul.f32 %v588, %v607
        %614 = vrot.lane.b32.xlu0 %v610, 32
        %v615 = vpop.permute.xlu0 %614
        %616 = vrot.lane.b32.xlu0 %v611, 32
        %v617 = vpop.permute.xlu0 %616
        %v620 = vadd.f32 %v600, %v615
        %v621 = vadd.f32 %v601, %v617
        %v622 = vtanh.pop %v620
        %v623 = vtanh.pop %v621
        %626 = vrot.lane.b32.xlu0 %v622, 64
        %v627 = vpop.permute.xlu0 %626
        %628 = vrot.lane.b32.xlu0 %v623, 64
        %v629 = vpop.permute.xlu0 %628
        %v632 = vmul.f32 %v586, %v627
        %v633 = vmul.f32 %v588, %v629
        %v636 = vrot.slane %v632, 7
        %v637 = vrot.slane %v633, 6
        %vm638 = vcmask 1041409
        %v639 = vsel %vm638, %v637, %v636
        %640 = vrot.lane.b32.xlu0 %v639, 32
        %v641 = vpop.permute.xlu0 %640
        %v642 = vsel %vm496, %v641, 0
        %644 = vmatprep.subr.mxu0 0.0
        %645 = vmatpush1.msra.mxu0 %v492
        %646 = vmatprep.subr.mxu0 0.0
        %647 = vmatpush1.msra.mxu0 %v493
        %648 = vmatprep.subr.mxu0 0.0
        %649 = vmatpush1.msra.mxu0 %v494
        %650 = vmatprep.subr.mxu0 0.0
        %651 = vmatpush1.msra.mxu0 %v495
        %652 = vmatprep.subr.mxu0 0.0
        %653 = vmatpush1.msra.mxu0 0.0
        %654 = vmatprep.subr.mxu0 0.0
        %655 = vmatpush1.msra.mxu0 0.0
        %656 = vmatprep.subr.mxu0 0.0
        %657 = vmatpush1.msra.mxu0 0.0
        %658 = vmatprep.subr.mxu0 0.0
        %659 = vmatpush1.msra.mxu0 0.0
        %660 = vmatprep.subr.mxu0 0.0
        %661 = vmatpush1.msra.mxu0 0.0
        %662 = vmatprep.subr.mxu0 0.0
        %663 = vmatpush1.msra.mxu0 0.0
        %664 = vmatprep.subr.mxu0 0.0
        %665 = vmatpush1.msra.mxu0 0.0
        %666 = vmatprep.subr.mxu0 0.0
        %667 = vmatpush1.msra.mxu0 0.0
        %668 = vmatprep.subr.mxu0 0.0
        %669 = vmatpush1.msra.mxu0 0.0
        %670 = vmatprep.subr.mxu0 0.0
        %671 = vmatpush1.msra.mxu0 0.0
        %672 = vmatprep.subr.mxu0 0.0
        %673 = vmatpush1.msra.mxu0 0.0
        %674 = vmatprep.subr.mxu0 0.0
        %675 = vmatpush1.msra.mxu0 0.0
        %676 = vmatprep.subr.mxu0 0.0
        %677 = vmatpush1.msra.mxu0 0.0
        %678 = vmatprep.subr.mxu0 0.0
        %679 = vmatpush1.msra.mxu0 0.0
        %680 = vmatprep.subr.mxu0 0.0
        %681 = vmatpush1.msra.mxu0 0.0
        %682 = vmatprep.subr.mxu0 0.0
        %683 = vmatpush1.msra.mxu0 0.0
        %684 = vmatprep.subr.mxu0 0.0
        %685 = vmatpush1.msra.mxu0 0.0
        %686 = vmatprep.subr.mxu0 0.0
        %687 = vmatpush1.msra.mxu0 0.0
        %688 = vmatprep.subr.mxu0 0.0
        %689 = vmatpush1.msra.mxu0 0.0
        %690 = vmatprep.subr.mxu0 0.0
        %691 = vmatpush1.msra.mxu0 0.0
        %692 = vmatprep.subr.mxu0 0.0
        %693 = vmatpush1.msra.mxu0 0.0
        %694 = vmatprep.subr.mxu0 0.0
        %695 = vmatpush1.msra.mxu0 0.0
        %696 = vmatprep.subr.mxu0 0.0
        %697 = vmatpush1.msra.mxu0 0.0
        %698 = vmatprep.subr.mxu0 0.0
        %699 = vmatpush1.msra.mxu0 0.0
        %700 = vmatprep.subr.mxu0 0.0
        %701 = vmatpush1.msra.mxu0 0.0
        %702 = vmatprep.subr.mxu0 0.0
        %703 = vmatpush1.msra.mxu0 0.0
        %704 = vmatprep.subr.mxu0 0.0
        %705 = vmatpush1.msra.mxu0 0.0
        %706 = vmatprep.subr.mxu0 0.0
        %707 = vmatpush1.msra.mxu0 0.0
        %708 = vmatprep.mubr.f32.mxu0 0.0
        %709 = vmatmul.mubr.f32.gmra.mrb[0].mxu0 %v642
        %v710 = vpop.f32.mrb[0].mxu0
        %v711 = vadd.f32 0.0, %v710
        %v712 = vpop.f32.mrb[0].mxu0
        %713 = vdwg.mxu0
        %v715 = vrot.slane %v711, 2
        %v716 = vrot.slane %v711, 3
        %v719 = vadd.f32 %v482, %v715
        %v720 = vadd.f32 %v487, %v716
        %v721 = vxor.u32 %v719, 2147483648
        %v722 = vxor.u32 %v720, 2147483648
        %v723 = vmul.f32 %v721, 1.442695
        %v724 = vpow.pop %v723
        %v725 = vmul.f32 %v722, 1.442695
        %v726 = vpow.pop %v725
        %v727 = vadd.f32 %v724, 1.0
        %v728 = vadd.f32 %v726, 1.0
        %v729 = vrcp.pop %v727
        %v730 = vmul.f32 1.0, %v729
        %v731 = vrcp.pop %v728
        %v732 = vmul.f32 1.0, %v731
        %v733 = vtanh.pop %v719
        %v734 = vtanh.pop %v720
        %v737 = vrot.slane %v620, 1
        %v738 = vrot.slane %v621, 1
        %v741 = vmul.f32 %v730, %v737
        %v742 = vmul.f32 %v732, %v738
        %745 = vrot.lane.b32.xlu0 %v733, 64
        %v746 = vpop.permute.xlu0 %745
        %747 = vrot.lane.b32.xlu0 %v734, 64
        %v748 = vpop.permute.xlu0 %747
        %v751 = vmul.f32 %v730, %v746
        %v752 = vmul.f32 %v732, %v748
        %755 = vrot.lane.b32.xlu0 %v751, 32
        %v756 = vpop.permute.xlu0 %755
        %757 = vrot.lane.b32.xlu0 %v752, 32
        %v758 = vpop.permute.xlu0 %757
        %v761 = vadd.f32 %v741, %v756
        %v762 = vadd.f32 %v742, %v758
        %v763 = vtanh.pop %v761
        %v764 = vtanh.pop %v762
        %767 = vrot.lane.b32.xlu0 %v763, 64
        %v768 = vpop.permute.xlu0 %767
        %769 = vrot.lane.b32.xlu0 %v764, 64
        %v770 = vpop.permute.xlu0 %769
        %v773 = vmul.f32 %v730, %v768
        %v774 = vmul.f32 %v732, %v770
        %v777 = vrot.slane %v773, 6
        %v778 = vrot.slane %v774, 5
        %v779 = vsel %vm638, %v778, %v777
        %780 = vrot.lane.b32.xlu0 %v779, 32
        %v781 = vpop.permute.xlu0 %780
        %v782 = vsel %vm496, %v781, 0
        %784 = vmatprep.subr.mxu0 0.0
        %785 = vmatpush1.msra.mxu0 %v492
        %786 = vmatprep.subr.mxu0 0.0
        %787 = vmatpush1.msra.mxu0 %v493
        %788 = vmatprep.subr.mxu0 0.0
        %789 = vmatpush1.msra.mxu0 %v494
        %790 = vmatprep.subr.mxu0 0.0
        %791 = vmatpush1.msra.mxu0 %v495
        %792 = vmatprep.subr.mxu0 0.0
        %793 = vmatpush1.msra.mxu0 0.0
        %794 = vmatprep.subr.mxu0 0.0
        %795 = vmatpush1.msra.mxu0 0.0
        %796 = vmatprep.subr.mxu0 0.0
        %797 = vmatpush1.msra.mxu0 0.0
        %798 = vmatprep.subr.mxu0 0.0
        %799 = vmatpush1.msra.mxu0 0.0
        %800 = vmatprep.subr.mxu0 0.0
        %801 = vmatpush1.msra.mxu0 0.0
        %802 = vmatprep.subr.mxu0 0.0
        %803 = vmatpush1.msra.mxu0 0.0
        %804 = vmatprep.subr.mxu0 0.0
        %805 = vmatpush1.msra.mxu0 0.0
        %806 = vmatprep.subr.mxu0 0.0
        %807 = vmatpush1.msra.mxu0 0.0
        %808 = vmatprep.subr.mxu0 0.0
        %809 = vmatpush1.msra.mxu0 0.0
        %810 = vmatprep.subr.mxu0 0.0
        %811 = vmatpush1.msra.mxu0 0.0
        %812 = vmatprep.subr.mxu0 0.0
        %813 = vmatpush1.msra.mxu0 0.0
        %814 = vmatprep.subr.mxu0 0.0
        %815 = vmatpush1.msra.mxu0 0.0
        %816 = vmatprep.subr.mxu0 0.0
        %817 = vmatpush1.msra.mxu0 0.0
        %818 = vmatprep.subr.mxu0 0.0
        %819 = vmatpush1.msra.mxu0 0.0
        %820 = vmatprep.subr.mxu0 0.0
        %821 = vmatpush1.msra.mxu0 0.0
        %822 = vmatprep.subr.mxu0 0.0
        %823 = vmatpush1.msra.mxu0 0.0
        %824 = vmatprep.subr.mxu0 0.0
        %825 = vmatpush1.msra.mxu0 0.0
        %826 = vmatprep.subr.mxu0 0.0
        %827 = vmatpush1.msra.mxu0 0.0
        %828 = vmatprep.subr.mxu0 0.0
        %829 = vmatpush1.msra.mxu0 0.0
        %830 = vmatprep.subr.mxu0 0.0
        %831 = vmatpush1.msra.mxu0 0.0
        %832 = vmatprep.subr.mxu0 0.0
        %833 = vmatpush1.msra.mxu0 0.0
        %834 = vmatprep.subr.mxu0 0.0
        %835 = vmatpush1.msra.mxu0 0.0
        %836 = vmatprep.subr.mxu0 0.0
        %837 = vmatpush1.msra.mxu0 0.0
        %838 = vmatprep.subr.mxu0 0.0
        %839 = vmatpush1.msra.mxu0 0.0
        %840 = vmatprep.subr.mxu0 0.0
        %841 = vmatpush1.msra.mxu0 0.0
        %842 = vmatprep.subr.mxu0 0.0
        %843 = vmatpush1.msra.mxu0 0.0
        %844 = vmatprep.subr.mxu0 0.0
        %845 = vmatpush1.msra.mxu0 0.0
        %846 = vmatprep.subr.mxu0 0.0
        %847 = vmatpush1.msra.mxu0 0.0
        %848 = vmatprep.mubr.f32.mxu0 0.0
        %849 = vmatmul.mubr.f32.gmra.mrb[0].mxu0 %v782
        %v850 = vpop.f32.mrb[0].mxu0
        %v851 = vadd.f32 0.0, %v850
        %v852 = vpop.f32.mrb[0].mxu0
        %853 = vdwg.mxu0
        %v855 = vrot.slane %v851, 3
        %v856 = vrot.slane %v851, 4
        %v859 = vadd.f32 %v482, %v855
        %v860 = vadd.f32 %v487, %v856
        %v861 = vxor.u32 %v859, 2147483648
        %v862 = vxor.u32 %v860, 2147483648
        %v863 = vmul.f32 %v861, 1.442695
        %v864 = vpow.pop %v863
        %v865 = vmul.f32 %v862, 1.442695
        %v866 = vpow.pop %v865
        %v867 = vadd.f32 %v864, 1.0
        %v868 = vadd.f32 %v866, 1.0
        %v869 = vrcp.pop %v867
        %v870 = vmul.f32 1.0, %v869
        %v871 = vrcp.pop %v868
        %v872 = vmul.f32 1.0, %v871
        %v873 = vtanh.pop %v859
        %v874 = vtanh.pop %v860
        %v877 = vrot.slane %v761, 1
        %v878 = vrot.slane %v762, 1
        %v881 = vmul.f32 %v870, %v877
        %v882 = vmul.f32 %v872, %v878
        %885 = vrot.lane.b32.xlu0 %v873, 64
        %v886 = vpop.permute.xlu0 %885
        %887 = vrot.lane.b32.xlu0 %v874, 64
        %v888 = vpop.permute.xlu0 %887
        %v891 = vmul.f32 %v870, %v886
        %v892 = vmul.f32 %v872, %v888
        %895 = vrot.lane.b32.xlu0 %v891, 32
        %v896 = vpop.permute.xlu0 %895
        %897 = vrot.lane.b32.xlu0 %v892, 32
        %v898 = vpop.permute.xlu0 %897
        %v901 = vadd.f32 %v881, %v896
        %v902 = vadd.f32 %v882, %v898
        %v903 = vtanh.pop %v901
        %v904 = vtanh.pop %v902
        %907 = vrot.lane.b32.xlu0 %v903, 64
        %v908 = vpop.permute.xlu0 %907
        %909 = vrot.lane.b32.xlu0 %v904, 64
        %v910 = vpop.permute.xlu0 %909
        %v913 = vmul.f32 %v870, %v908
        %v914 = vmul.f32 %v872, %v910
        %v917 = vrot.slane %v913, 5
        %v918 = vrot.slane %v914, 4
        %v919 = vsel %vm638, %v918, %v917
        %920 = vrot.lane.b32.xlu0 %v919, 32
        %v921 = vpop.permute.xlu0 %920
        %v922 = vsel %vm496, %v921, 0
        %924 = vmatprep.subr.mxu0 0.0
        %925 = vmatpush1.msra.mxu0 %v492
        %926 = vmatprep.subr.mxu0 0.0
        %927 = vmatpush1.msra.mxu0 %v493
        %928 = vmatprep.subr.mxu0 0.0
        %929 = vmatpush1.msra.mxu0 %v494
        %930 = vmatprep.subr.mxu0 0.0
        %931 = vmatpush1.msra.mxu0 %v495
        %932 = vmatprep.subr.mxu0 0.0
        %933 = vmatpush1.msra.mxu0 0.0
        %934 = vmatprep.subr.mxu0 0.0
        %935 = vmatpush1.msra.mxu0 0.0
        %936 = vmatprep.subr.mxu0 0.0
        %937 = vmatpush1.msra.mxu0 0.0
        %938 = vmatprep.subr.mxu0 0.0
        %939 = vmatpush1.msra.mxu0 0.0
        %940 = vmatprep.subr.mxu0 0.0
        %941 = vmatpush1.msra.mxu0 0.0
        %942 = vmatprep.subr.mxu0 0.0
        %943 = vmatpush1.msra.mxu0 0.0
        %944 = vmatprep.subr.mxu0 0.0
        %945 = vmatpush1.msra.mxu0 0.0
        %946 = vmatprep.subr.mxu0 0.0
        %947 = vmatpush1.msra.mxu0 0.0
        %948 = vmatprep.subr.mxu0 0.0
        %949 = vmatpush1.msra.mxu0 0.0
        %950 = vmatprep.subr.mxu0 0.0
        %951 = vmatpush1.msra.mxu0 0.0
        %952 = vmatprep.subr.mxu0 0.0
        %953 = vmatpush1.msra.mxu0 0.0
        %954 = vmatprep.subr.mxu0 0.0
        %955 = vmatpush1.msra.mxu0 0.0
        %956 = vmatprep.subr.mxu0 0.0
        %957 = vmatpush1.msra.mxu0 0.0
        %958 = vmatprep.subr.mxu0 0.0
        %959 = vmatpush1.msra.mxu0 0.0
        %960 = vmatprep.subr.mxu0 0.0
        %961 = vmatpush1.msra.mxu0 0.0
        %962 = vmatprep.subr.mxu0 0.0
        %963 = vmatpush1.msra.mxu0 0.0
        %964 = vmatprep.subr.mxu0 0.0
        %965 = vmatpush1.msra.mxu0 0.0
        %966 = vmatprep.subr.mxu0 0.0
        %967 = vmatpush1.msra.mxu0 0.0
        %968 = vmatprep.subr.mxu0 0.0
        %969 = vmatpush1.msra.mxu0 0.0
        %970 = vmatprep.subr.mxu0 0.0
        %971 = vmatpush1.msra.mxu0 0.0
        %972 = vmatprep.subr.mxu0 0.0
        %973 = vmatpush1.msra.mxu0 0.0
        %974 = vmatprep.subr.mxu0 0.0
        %975 = vmatpush1.msra.mxu0 0.0
        %976 = vmatprep.subr.mxu0 0.0
        %977 = vmatpush1.msra.mxu0 0.0
        %978 = vmatprep.subr.mxu0 0.0
        %979 = vmatpush1.msra.mxu0 0.0
        %980 = vmatprep.subr.mxu0 0.0
        %981 = vmatpush1.msra.mxu0 0.0
        %982 = vmatprep.subr.mxu0 0.0
        %983 = vmatpush1.msra.mxu0 0.0
        %984 = vmatprep.subr.mxu0 0.0
        %985 = vmatpush1.msra.mxu0 0.0
        %986 = vmatprep.subr.mxu0 0.0
        %987 = vmatpush1.msra.mxu0 0.0
        %988 = vmatprep.mubr.f32.mxu0 0.0
        %989 = vmatmul.mubr.f32.gmra.mrb[0].mxu0 %v922
        %v990 = vpop.f32.mrb[0].mxu0
        %v991 = vadd.f32 0.0, %v990
        %v992 = vpop.f32.mrb[0].mxu0
        %993 = vdwg.mxu0
        %v995 = vrot.slane %v991, 4
        %v996 = vrot.slane %v991, 5
        %v999 = vadd.f32 %v482, %v995
        %v1000 = vadd.f32 %v487, %v996
        %v1001 = vxor.u32 %v999, 2147483648
        %v1002 = vxor.u32 %v1000, 2147483648
        %v1003 = vmul.f32 %v1001, 1.442695
        %v1004 = vpow.pop %v1003
        %v1005 = vmul.f32 %v1002, 1.442695
        %v1006 = vpow.pop %v1005
        %v1007 = vadd.f32 %v1004, 1.0
        %v1008 = vadd.f32 %v1006, 1.0
        %v1009 = vrcp.pop %v1007
        %v1010 = vmul.f32 1.0, %v1009
        %v1011 = vrcp.pop %v1008
        %v1012 = vmul.f32 1.0, %v1011
        %v1013 = vtanh.pop %v999
        %v1014 = vtanh.pop %v1000
        %v1017 = vrot.slane %v901, 1
        %v1018 = vrot.slane %v902, 1
        %v1021 = vmul.f32 %v1010, %v1017
        %v1022 = vmul.f32 %v1012, %v1018
        %1025 = vrot.lane.b32.xlu0 %v1013, 64
        %v1026 = vpop.permute.xlu0 %1025
        %1027 = vrot.lane.b32.xlu0 %v1014, 64
        %v1028 = vpop.permute.xlu0 %1027
        %v1031 = vmul.f32 %v1010, %v1026
        %v1032 = vmul.f32 %v1012, %v1028
        %1035 = vrot.lane.b32.xlu0 %v1031, 32
        %v1036 = vpop.permute.xlu0 %1035
        %1037 = vrot.lane.b32.xlu0 %v1032, 32
        %v1038 = vpop.permute.xlu0 %1037
        %v1041 = vadd.f32 %v1021, %v1036
        %v1042 = vadd.f32 %v1022, %v1038
        %v1043 = vtanh.pop %v1041
        %v1044 = vtanh.pop %v1042
        %1047 = vrot.lane.b32.xlu0 %v1043, 64
        %v1048 = vpop.permute.xlu0 %1047
        %1049 = vrot.lane.b32.xlu0 %v1044, 64
        %v1050 = vpop.permute.xlu0 %1049
        %v1053 = vmul.f32 %v1010, %v1048
        %v1054 = vmul.f32 %v1012, %v1050
        %v1057 = vrot.slane %v1053, 4
        %v1058 = vrot.slane %v1054, 3
        %v1059 = vsel %vm638, %v1058, %v1057
        %1060 = vrot.lane.b32.xlu0 %v1059, 32
        %v1061 = vpop.permute.xlu0 %1060
        %v1062 = vsel %vm496, %v1061, 0
        %1064 = vmatprep.subr.mxu0 0.0
        %1065 = vmatpush1.msra.mxu0 %v492
        %1066 = vmatprep.subr.mxu0 0.0
        %1067 = vmatpush1.msra.mxu0 %v493
        %1068 = vmatprep.subr.mxu0 0.0
        %1069 = vmatpush1.msra.mxu0 %v494
        %1070 = vmatprep.subr.mxu0 0.0
        %1071 = vmatpush1.msra.mxu0 %v495
        %1072 = vmatprep.subr.mxu0 0.0
        %1073 = vmatpush1.msra.mxu0 0.0
        %1074 = vmatprep.subr.mxu0 0.0
        %1075 = vmatpush1.msra.mxu0 0.0
        %1076 = vmatprep.subr.mxu0 0.0
        %1077 = vmatpush1.msra.mxu0 0.0
        %1078 = vmatprep.subr.mxu0 0.0
        %1079 = vmatpush1.msra.mxu0 0.0
        %1080 = vmatprep.subr.mxu0 0.0
        %1081 = vmatpush1.msra.mxu0 0.0
        %1082 = vmatprep.subr.mxu0 0.0
        %1083 = vmatpush1.msra.mxu0 0.0
        %1084 = vmatprep.subr.mxu0 0.0
        %1085 = vmatpush1.msra.mxu0 0.0
        %1086 = vmatprep.subr.mxu0 0.0
        %1087 = vmatpush1.msra.mxu0 0.0
        %1088 = vmatprep.subr.mxu0 0.0
        %1089 = vmatpush1.msra.mxu0 0.0
        %1090 = vmatprep.subr.mxu0 0.0
        %1091 = vmatpush1.msra.mxu0 0.0
        %1092 = vmatprep.subr.mxu0 0.0
        %1093 = vmatpush1.msra.mxu0 0.0
        %1094 = vmatprep.subr.mxu0 0.0
        %1095 = vmatpush1.msra.mxu0 0.0
        %1096 = vmatprep.subr.mxu0 0.0
        %1097 = vmatpush1.msra.mxu0 0.0
        %1098 = vmatprep.subr.mxu0 0.0
        %1099 = vmatpush1.msra.mxu0 0.0
        %1100 = vmatprep.subr.mxu0 0.0
        %1101 = vmatpush1.msra.mxu0 0.0
        %1102 = vmatprep.subr.mxu0 0.0
        %1103 = vmatpush1.msra.mxu0 0.0
        %1104 = vmatprep.subr.mxu0 0.0
        %1105 = vmatpush1.msra.mxu0 0.0
        %1106 = vmatprep.subr.mxu0 0.0
        %1107 = vmatpush1.msra.mxu0 0.0
        %1108 = vmatprep.subr.mxu0 0.0
        %1109 = vmatpush1.msra.mxu0 0.0
        %1110 = vmatprep.subr.mxu0 0.0
        %1111 = vmatpush1.msra.mxu0 0.0
        %1112 = vmatprep.subr.mxu0 0.0
        %1113 = vmatpush1.msra.mxu0 0.0
        %1114 = vmatprep.subr.mxu0 0.0
        %1115 = vmatpush1.msra.mxu0 0.0
        %1116 = vmatprep.subr.mxu0 0.0
        %1117 = vmatpush1.msra.mxu0 0.0
        %1118 = vmatprep.subr.mxu0 0.0
        %1119 = vmatpush1.msra.mxu0 0.0
        %1120 = vmatprep.subr.mxu0 0.0
        %1121 = vmatpush1.msra.mxu0 0.0
        %1122 = vmatprep.subr.mxu0 0.0
        %1123 = vmatpush1.msra.mxu0 0.0
        %1124 = vmatprep.subr.mxu0 0.0
        %1125 = vmatpush1.msra.mxu0 0.0
        %1126 = vmatprep.subr.mxu0 0.0
        %1127 = vmatpush1.msra.mxu0 0.0
        %1128 = vmatprep.mubr.f32.mxu0 0.0
        %1129 = vmatmul.mubr.f32.gmra.mrb[0].mxu0 %v1062
        %v1130 = vpop.f32.mrb[0].mxu0
        %v1131 = vadd.f32 0.0, %v1130
        %v1132 = vpop.f32.mrb[0].mxu0
        %1133 = vdwg.mxu0
        %v1135 = vrot.slane %v1131, 5
        %v1136 = vrot.slane %v1131, 6
        %v1139 = vadd.f32 %v482, %v1135
        %v1140 = vadd.f32 %v487, %v1136
        %v1141 = vxor.u32 %v1139, 2147483648
        %v1142 = vxor.u32 %v1140, 2147483648
        %v1143 = vmul.f32 %v1141, 1.442695
        %v1144 = vpow.pop %v1143
        %v1145 = vmul.f32 %v1142, 1.442695
        %v1146 = vpow.pop %v1145
        %v1147 = vadd.f32 %v1144, 1.0
        %v1148 = vadd.f32 %v1146, 1.0
        %v1149 = vrcp.pop %v1147
        %v1150 = vmul.f32 1.0, %v1149
        %v1151 = vrcp.pop %v1148
        %v1152 = vmul.f32 1.0, %v1151
        %v1153 = vtanh.pop %v1139
        %v1154 = vtanh.pop %v1140
        %v1157 = vrot.slane %v1041, 1
        %v1158 = vrot.slane %v1042, 1
        %v1161 = vmul.f32 %v1150, %v1157
        %v1162 = vmul.f32 %v1152, %v1158
        %1165 = vrot.lane.b32.xlu0 %v1153, 64
        %v1166 = vpop.permute.xlu0 %1165
        %1167 = vrot.lane.b32.xlu0 %v1154, 64
        %v1168 = vpop.permute.xlu0 %1167
        %v1171 = vmul.f32 %v1150, %v1166
        %v1172 = vmul.f32 %v1152, %v1168
        %1175 = vrot.lane.b32.xlu0 %v1171, 32
        %v1176 = vpop.permute.xlu0 %1175
        %1177 = vrot.lane.b32.xlu0 %v1172, 32
        %v1178 = vpop.permute.xlu0 %1177
        %v1181 = vadd.f32 %v1161, %v1176
        %v1182 = vadd.f32 %v1162, %v1178
        %v1183 = vtanh.pop %v1181
        %v1184 = vtanh.pop %v1182
        %1187 = vrot.lane.b32.xlu0 %v1183, 64
        %v1188 = vpop.permute.xlu0 %1187
        %1189 = vrot.lane.b32.xlu0 %v1184, 64
        %v1190 = vpop.permute.xlu0 %1189
        %v1193 = vmul.f32 %v1150, %v1188
        %v1194 = vmul.f32 %v1152, %v1190
        %v1197 = vrot.slane %v1193, 3
        %v1198 = vrot.slane %v1194, 2
        %v1199 = vsel %vm638, %v1198, %v1197
        %1200 = vrot.lane.b32.xlu0 %v1199, 32
        %v1201 = vpop.permute.xlu0 %1200
        %v1202 = vsel %vm496, %v1201, 0
        %1204 = vmatprep.subr.mxu0 0.0
        %1205 = vmatpush1.msra.mxu0 %v492
        %1206 = vmatprep.subr.mxu0 0.0
        %1207 = vmatpush1.msra.mxu0 %v493
        %1208 = vmatprep.subr.mxu0 0.0
        %1209 = vmatpush1.msra.mxu0 %v494
        %1210 = vmatprep.subr.mxu0 0.0
        %1211 = vmatpush1.msra.mxu0 %v495
        %1212 = vmatprep.subr.mxu0 0.0
        %1213 = vmatpush1.msra.mxu0 0.0
        %1214 = vmatprep.subr.mxu0 0.0
        %1215 = vmatpush1.msra.mxu0 0.0
        %1216 = vmatprep.subr.mxu0 0.0
        %1217 = vmatpush1.msra.mxu0 0.0
        %1218 = vmatprep.subr.mxu0 0.0
        %1219 = vmatpush1.msra.mxu0 0.0
        %1220 = vmatprep.subr.mxu0 0.0
        %1221 = vmatpush1.msra.mxu0 0.0
        %1222 = vmatprep.subr.mxu0 0.0
        %1223 = vmatpush1.msra.mxu0 0.0
        %1224 = vmatprep.subr.mxu0 0.0
        %1225 = vmatpush1.msra.mxu0 0.0
        %1226 = vmatprep.subr.mxu0 0.0
        %1227 = vmatpush1.msra.mxu0 0.0
        %1228 = vmatprep.subr.mxu0 0.0
        %1229 = vmatpush1.msra.mxu0 0.0
        %1230 = vmatprep.subr.mxu0 0.0
        %1231 = vmatpush1.msra.mxu0 0.0
        %1232 = vmatprep.subr.mxu0 0.0
        %1233 = vmatpush1.msra.mxu0 0.0
        %1234 = vmatprep.subr.mxu0 0.0
        %1235 = vmatpush1.msra.mxu0 0.0
        %1236 = vmatprep.subr.mxu0 0.0
        %1237 = vmatpush1.msra.mxu0 0.0
        %1238 = vmatprep.subr.mxu0 0.0
        %1239 = vmatpush1.msra.mxu0 0.0
        %1240 = vmatprep.subr.mxu0 0.0
        %1241 = vmatpush1.msra.mxu0 0.0
        %1242 = vmatprep.subr.mxu0 0.0
        %1243 = vmatpush1.msra.mxu0 0.0
        %1244 = vmatprep.subr.mxu0 0.0
        %1245 = vmatpush1.msra.mxu0 0.0
        %1246 = vmatprep.subr.mxu0 0.0
        %1247 = vmatpush1.msra.mxu0 0.0
        %1248 = vmatprep.subr.mxu0 0.0
        %1249 = vmatpush1.msra.mxu0 0.0
        %1250 = vmatprep.subr.mxu0 0.0
        %1251 = vmatpush1.msra.mxu0 0.0
        %1252 = vmatprep.subr.mxu0 0.0
        %1253 = vmatpush1.msra.mxu0 0.0
        %1254 = vmatprep.subr.mxu0 0.0
        %1255 = vmatpush1.msra.mxu0 0.0
        %1256 = vmatprep.subr.mxu0 0.0
        %1257 = vmatpush1.msra.mxu0 0.0
        %1258 = vmatprep.subr.mxu0 0.0
        %1259 = vmatpush1.msra.mxu0 0.0
        %1260 = vmatprep.subr.mxu0 0.0
        %1261 = vmatpush1.msra.mxu0 0.0
        %1262 = vmatprep.subr.mxu0 0.0
        %1263 = vmatpush1.msra.mxu0 0.0
        %1264 = vmatprep.subr.mxu0 0.0
        %1265 = vmatpush1.msra.mxu0 0.0
        %1266 = vmatprep.subr.mxu0 0.0
        %1267 = vmatpush1.msra.mxu0 0.0
        %1268 = vmatprep.mubr.f32.mxu0 0.0
        %1269 = vmatmul.mubr.f32.gmra.mrb[0].mxu0 %v1202
        %v1270 = vpop.f32.mrb[0].mxu0
        %v1271 = vadd.f32 0.0, %v1270
        %v1272 = vpop.f32.mrb[0].mxu0
        %1273 = vdwg.mxu0
        %v1275 = vrot.slane %v1271, 6
        %v1276 = vrot.slane %v1271, 7
        %v1279 = vadd.f32 %v482, %v1275
        %v1280 = vadd.f32 %v487, %v1276
        %v1281 = vxor.u32 %v1279, 2147483648
        %v1282 = vxor.u32 %v1280, 2147483648
        %v1283 = vmul.f32 %v1281, 1.442695
        %v1284 = vpow.pop %v1283
        %v1285 = vmul.f32 %v1282, 1.442695
        %v1286 = vpow.pop %v1285
        %v1287 = vadd.f32 %v1284, 1.0
        %v1288 = vadd.f32 %v1286, 1.0
        %v1289 = vrcp.pop %v1287
        %v1290 = vmul.f32 1.0, %v1289
        %v1291 = vrcp.pop %v1288
        %v1292 = vmul.f32 1.0, %v1291
        %v1293 = vtanh.pop %v1279
        %v1294 = vtanh.pop %v1280
        %v1297 = vrot.slane %v1181, 1
        %v1298 = vrot.slane %v1182, 1
        %v1301 = vmul.f32 %v1290, %v1297
        %v1302 = vmul.f32 %v1292, %v1298
        %1305 = vrot.lane.b32.xlu0 %v1293, 64
        %v1306 = vpop.permute.xlu0 %1305
        %1307 = vrot.lane.b32.xlu0 %v1294, 64
        %v1308 = vpop.permute.xlu0 %1307
        %v1311 = vmul.f32 %v1290, %v1306
        %v1312 = vmul.f32 %v1292, %v1308
        %1315 = vrot.lane.b32.xlu0 %v1311, 32
        %v1316 = vpop.permute.xlu0 %1315
        %1317 = vrot.lane.b32.xlu0 %v1312, 32
        %v1318 = vpop.permute.xlu0 %1317
        %v1321 = vadd.f32 %v1301, %v1316
        %v1322 = vadd.f32 %v1302, %v1318
        %v1323 = vtanh.pop %v1321
        %v1324 = vtanh.pop %v1322
        %1327 = vrot.lane.b32.xlu0 %v1323, 64
        %v1328 = vpop.permute.xlu0 %1327
        %1329 = vrot.lane.b32.xlu0 %v1324, 64
        %v1330 = vpop.permute.xlu0 %1329
        %v1333 = vmul.f32 %v1290, %v1328
        %v1334 = vmul.f32 %v1292, %v1330
        %v1337 = vrot.slane %v1333, 2
        %v1338 = vrot.slane %v1334, 1
        %v1339 = vsel %vm638, %v1338, %v1337
        %1340 = vrot.lane.b32.xlu0 %v1339, 32
        %v1341 = vpop.permute.xlu0 %1340
        %v1342 = vsel %vm496, %v1341, 0
        %1344 = vmatprep.subr.mxu0 0.0
        %1345 = vmatpush1.msra.mxu0 %v492
        %1346 = vmatprep.subr.mxu0 0.0
        %1347 = vmatpush1.msra.mxu0 %v493
        %1348 = vmatprep.subr.mxu0 0.0
        %1349 = vmatpush1.msra.mxu0 %v494
        %1350 = vmatprep.subr.mxu0 0.0
        %1351 = vmatpush1.msra.mxu0 %v495
        %1352 = vmatprep.subr.mxu0 0.0
        %1353 = vmatpush1.msra.mxu0 0.0
        %1354 = vmatprep.subr.mxu0 0.0
        %1355 = vmatpush1.msra.mxu0 0.0
        %1356 = vmatprep.subr.mxu0 0.0
        %1357 = vmatpush1.msra.mxu0 0.0
        %1358 = vmatprep.subr.mxu0 0.0
        %1359 = vmatpush1.msra.mxu0 0.0
        %1360 = vmatprep.subr.mxu0 0.0
        %1361 = vmatpush1.msra.mxu0 0.0
        %1362 = vmatprep.subr.mxu0 0.0
        %1363 = vmatpush1.msra.mxu0 0.0
        %1364 = vmatprep.subr.mxu0 0.0
        %1365 = vmatpush1.msra.mxu0 0.0
        %1366 = vmatprep.subr.mxu0 0.0
        %1367 = vmatpush1.msra.mxu0 0.0
        %1368 = vmatprep.subr.mxu0 0.0
        %1369 = vmatpush1.msra.mxu0 0.0
        %1370 = vmatprep.subr.mxu0 0.0
        %1371 = vmatpush1.msra.mxu0 0.0
        %1372 = vmatprep.subr.mxu0 0.0
        %1373 = vmatpush1.msra.mxu0 0.0
        %1374 = vmatprep.subr.mxu0 0.0
        %1375 = vmatpush1.msra.mxu0 0.0
        %1376 = vmatprep.subr.mxu0 0.0
        %1377 = vmatpush1.msra.mxu0 0.0
        %1378 = vmatprep.subr.mxu0 0.0
        %1379 = vmatpush1.msra.mxu0 0.0
        %1380 = vmatprep.subr.mxu0 0.0
        %1381 = vmatpush1.msra.mxu0 0.0
        %1382 = vmatprep.subr.mxu0 0.0
        %1383 = vmatpush1.msra.mxu0 0.0
        %1384 = vmatprep.subr.mxu0 0.0
        %1385 = vmatpush1.msra.mxu0 0.0
        %1386 = vmatprep.subr.mxu0 0.0
        %1387 = vmatpush1.msra.mxu0 0.0
        %1388 = vmatprep.subr.mxu0 0.0
        %1389 = vmatpush1.msra.mxu0 0.0
        %1390 = vmatprep.subr.mxu0 0.0
        %1391 = vmatpush1.msra.mxu0 0.0
        %1392 = vmatprep.subr.mxu0 0.0
        %1393 = vmatpush1.msra.mxu0 0.0
        %1394 = vmatprep.subr.mxu0 0.0
        %1395 = vmatpush1.msra.mxu0 0.0
        %1396 = vmatprep.subr.mxu0 0.0
        %1397 = vmatpush1.msra.mxu0 0.0
        %1398 = vmatprep.subr.mxu0 0.0
        %1399 = vmatpush1.msra.mxu0 0.0
        %1400 = vmatprep.subr.mxu0 0.0
        %1401 = vmatpush1.msra.mxu0 0.0
        %1402 = vmatprep.subr.mxu0 0.0
        %1403 = vmatpush1.msra.mxu0 0.0
        %1404 = vmatprep.subr.mxu0 0.0
        %1405 = vmatpush1.msra.mxu0 0.0
        %1406 = vmatprep.subr.mxu0 0.0
        %1407 = vmatpush1.msra.mxu0 0.0
        %1408 = vmatprep.mubr.f32.mxu0 0.0
        %1409 = vmatmul.mubr.f32.gmra.mrb[0].mxu0 %v1342
        %v1410 = vpop.f32.mrb[0].mxu0
        %v1411 = vadd.f32 0.0, %v1410
        %v1412 = vpop.f32.mrb[0].mxu0
        %1413 = vdwg.mxu0
        %v1415 = vrot.slane %v1411, 7
        %v1418 = vadd.f32 %v482, %v1415
        %v1419 = vadd.f32 %v487, %v1411
        %v1420 = vxor.u32 %v1418, 2147483648
        %v1421 = vxor.u32 %v1419, 2147483648
        %v1422 = vmul.f32 %v1420, 1.442695
        %v1423 = vpow.pop %v1422
        %v1424 = vmul.f32 %v1421, 1.442695
        %v1425 = vpow.pop %v1424
        %v1426 = vadd.f32 %v1423, 1.0
        %v1427 = vadd.f32 %v1425, 1.0
        %v1428 = vrcp.pop %v1426
        %v1429 = vmul.f32 1.0, %v1428
        %v1430 = vrcp.pop %v1427
        %v1431 = vmul.f32 1.0, %v1430
        %v1432 = vtanh.pop %v1418
        %v1433 = vtanh.pop %v1419
        %v1436 = vrot.slane %v1321, 1
        %v1437 = vrot.slane %v1322, 1
        %v1440 = vmul.f32 %v1429, %v1436
        %v1441 = vmul.f32 %v1431, %v1437
        %1444 = vrot.lane.b32.xlu0 %v1432, 64
        %v1445 = vpop.permute.xlu0 %1444
        %1446 = vrot.lane.b32.xlu0 %v1433, 64
        %v1447 = vpop.permute.xlu0 %1446
        %v1450 = vmul.f32 %v1429, %v1445
        %v1451 = vmul.f32 %v1431, %v1447
        %1454 = vrot.lane.b32.xlu0 %v1450, 32
        %v1455 = vpop.permute.xlu0 %1454
        %1456 = vrot.lane.b32.xlu0 %v1451, 32
        %v1457 = vpop.permute.xlu0 %1456
        %v1460 = vadd.f32 %v1440, %v1455
        %v1461 = vadd.f32 %v1441, %v1457
        %v1462 = vtanh.pop %v1460
        %v1463 = vtanh.pop %v1461
        %1466 = vrot.lane.b32.xlu0 %v1462, 64
        %v1467 = vpop.permute.xlu0 %1466
        %1468 = vrot.lane.b32.xlu0 %v1463, 64
        %v1469 = vpop.permute.xlu0 %1468
        %v1472 = vmul.f32 %v1429, %v1467
        %v1473 = vmul.f32 %v1431, %v1469
        %v1476 = vrot.slane %v1472, 1
        %v1477 = vsel %vm638, %v1473, %v1476
        %1478 = vrot.lane.b32.xlu0 %v1477, 32
        %v1479 = vpop.permute.xlu0 %1478
        %v1480 = vsel %vm496, %v1479, 0
        %1482 = vmatprep.subr.mxu0 0.0
        %1483 = vmatpush1.msra.mxu0 %v492
        %1484 = vmatprep.subr.mxu0 0.0
        %1485 = vmatpush1.msra.mxu0 %v493
        %1486 = vmatprep.subr.mxu0 0.0
        %1487 = vmatpush1.msra.mxu0 %v494
        %1488 = vmatprep.subr.mxu0 0.0
        %1489 = vmatpush1.msra.mxu0 %v495
        %1490 = vmatprep.subr.mxu0 0.0
        %1491 = vmatpush1.msra.mxu0 0.0
        %1492 = vmatprep.subr.mxu0 0.0
        %1493 = vmatpush1.msra.mxu0 0.0
        %1494 = vmatprep.subr.mxu0 0.0
        %1495 = vmatpush1.msra.mxu0 0.0
        %1496 = vmatprep.subr.mxu0 0.0
        %1497 = vmatpush1.msra.mxu0 0.0
        %1498 = vmatprep.subr.mxu0 0.0
        %1499 = vmatpush1.msra.mxu0 0.0
        %1500 = vmatprep.subr.mxu0 0.0
        %1501 = vmatpush1.msra.mxu0 0.0
        %1502 = vmatprep.subr.mxu0 0.0
        %1503 = vmatpush1.msra.mxu0 0.0
        %1504 = vmatprep.subr.mxu0 0.0
        %1505 = vmatpush1.msra.mxu0 0.0
        %1506 = vmatprep.subr.mxu0 0.0
        %1507 = vmatpush1.msra.mxu0 0.0
        %1508 = vmatprep.subr.mxu0 0.0
        %1509 = vmatpush1.msra.mxu0 0.0
        %1510 = vmatprep.subr.mxu0 0.0
        %1511 = vmatpush1.msra.mxu0 0.0
        %1512 = vmatprep.subr.mxu0 0.0
        %1513 = vmatpush1.msra.mxu0 0.0
        %1514 = vmatprep.subr.mxu0 0.0
        %1515 = vmatpush1.msra.mxu0 0.0
        %1516 = vmatprep.subr.mxu0 0.0
        %1517 = vmatpush1.msra.mxu0 0.0
        %1518 = vmatprep.subr.mxu0 0.0
        %1519 = vmatpush1.msra.mxu0 0.0
        %1520 = vmatprep.subr.mxu0 0.0
        %1521 = vmatpush1.msra.mxu0 0.0
        %1522 = vmatprep.subr.mxu0 0.0
        %1523 = vmatpush1.msra.mxu0 0.0
        %1524 = vmatprep.subr.mxu0 0.0
        %1525 = vmatpush1.msra.mxu0 0.0
        %1526 = vmatprep.subr.mxu0 0.0
        %1527 = vmatpush1.msra.mxu0 0.0
        %1528 = vmatprep.subr.mxu0 0.0
        %1529 = vmatpush1.msra.mxu0 0.0
        %1530 = vmatprep.subr.mxu0 0.0
        %1531 = vmatpush1.msra.mxu0 0.0
        %1532 = vmatprep.subr.mxu0 0.0
        %1533 = vmatpush1.msra.mxu0 0.0
        %1534 = vmatprep.subr.mxu0 0.0
        %1535 = vmatpush1.msra.mxu0 0.0
        %1536 = vmatprep.subr.mxu0 0.0
        %1537 = vmatpush1.msra.mxu0 0.0
        %1538 = vmatprep.subr.mxu0 0.0
        %1539 = vmatpush1.msra.mxu0 0.0
        %1540 = vmatprep.subr.mxu0 0.0
        %1541 = vmatpush1.msra.mxu0 0.0
        %1542 = vmatprep.subr.mxu0 0.0
        %1543 = vmatpush1.msra.mxu0 0.0
        %1544 = vmatprep.subr.mxu0 0.0
        %1545 = vmatpush1.msra.mxu0 0.0
        %1546 = vmatprep.mubr.f32.mxu0 0.0
        %1547 = vmatmul.mubr.f32.gmra.mrb[0].mxu0 %v1480
        %v1548 = vpop.f32.mrb[0].mxu0
        %v1549 = vadd.f32 0.0, %v1548
        %v1550 = vpop.f32.mrb[0].mxu0
        %1551 = vdwg.mxu0
        %v1553 = vrot.slane %v1549, 1
        %v1556 = vadd.f32 %v482, %v1549
        %v1557 = vadd.f32 %v487, %v1553
        %v1558 = vxor.u32 %v1556, 2147483648
        %v1559 = vxor.u32 %v1557, 2147483648
        %v1560 = vmul.f32 %v1558, 1.442695
        %v1561 = vpow.pop %v1560
        %v1562 = vmul.f32 %v1559, 1.442695
        %v1563 = vpow.pop %v1562
        %v1564 = vadd.f32 %v1561, 1.0
        %v1565 = vadd.f32 %v1563, 1.0
        %v1566 = vrcp.pop %v1564
        %v1567 = vmul.f32 1.0, %v1566
        %v1568 = vrcp.pop %v1565
        %v1569 = vmul.f32 1.0, %v1568
        %v1570 = vtanh.pop %v1556
        %v1571 = vtanh.pop %v1557
        %v1574 = vrot.slane %v1460, 1
        %v1575 = vrot.slane %v1461, 1
        %v1578 = vmul.f32 %v1567, %v1574
        %v1579 = vmul.f32 %v1569, %v1575
        %1582 = vrot.lane.b32.xlu0 %v1570, 64
        %v1583 = vpop.permute.xlu0 %1582
        %1584 = vrot.lane.b32.xlu0 %v1571, 64
        %v1585 = vpop.permute.xlu0 %1584
        %v1588 = vmul.f32 %v1567, %v1583
        %v1589 = vmul.f32 %v1569, %v1585
        %1592 = vrot.lane.b32.xlu0 %v1588, 32
        %v1593 = vpop.permute.xlu0 %1592
        %1594 = vrot.lane.b32.xlu0 %v1589, 32
        %v1595 = vpop.permute.xlu0 %1594
        %v1598 = vadd.f32 %v1578, %v1593
        %v1599 = vadd.f32 %v1579, %v1595
        %v1600 = vtanh.pop %v1598
        %v1601 = vtanh.pop %v1599
        %1604 = vrot.lane.b32.xlu0 %v1600, 64
        %v1605 = vpop.permute.xlu0 %1604
        %1606 = vrot.lane.b32.xlu0 %v1601, 64
        %v1607 = vpop.permute.xlu0 %1606
        %v1610 = vmul.f32 %v1567, %v1605
        %v1611 = vmul.f32 %v1569, %v1607
        %v1614 = vrot.slane %v1611, 7
        %v1615 = vsel %vm638, %v1614, %v1610
        %1616 = vrot.lane.b32.xlu0 %v1615, 32
        %v1617 = vpop.permute.xlu0 %1616
        %vm1619 = vcmask 254976
        %1620 = vst.msk [vmem:[#allocation2] sm:$0x3] %vm1619, %v1617
        %v1623 = vrot.slane %v1599, 7
        %v1624 = vsel %vm638, %v1623, %v1598
        %1625 = vrot.lane.b32.xlu0 %v1624, 96
        %v1626 = vpop.permute.xlu0 %1625
        %1628 = vst.msk [vmem:[#allocation3] sm:$0x3] %vm1619, %v1626
        %p1629 = scmp.eq.s32.totalorder %s26, 1
        // Predicated region
        $region73: #{bilstm_head.1} parent=59 // pred_check
          %p1630 = pneg %p1629
        $region74: #{bilstm_head.1} parent=59 // pred_check_branch
          %1632 = sbr.rel (%p1630) target = $region76
        $region75: #{bilstm_head.1} parent=59 // pred_region
          %v1633 = vld [vmem:[%s347] sm:$0x1]
          %v1634 = vld [vmem:[%s347 + $0x8] sm:$0x1]
          %v1635 = vld [vmem:[%s1] sm:$0xff]
          %v1636 = vld [vmem:[%s1 + $0x8] sm:$0xff]
          %v1637 = vld [vmem:[%s1 + $0x10] sm:$0xff]
          %v1638 = vld [vmem:[%s1 + $0x18] sm:$0xff]
          %v1639 = vld [vmem:[%s1 + $0x20] sm:$0xff]
          %v1640 = vld [vmem:[%s1 + $0x28] sm:$0xff]
          %v1641 = vld [vmem:[%s1 + $0x30] sm:$0xff]
          %v1642 = vld [vmem:[%s1 + $0x38] sm:$0xff]
          %v1643 = vld [vmem:[%s2] sm:$0x1]
          %v1645 = vlaneseq
          %v1646 = vshrl.u32 %v1645, 7
          %v1647 = vsub.s32 0, %v1646
          %v1648 = vrot.slane %v1643, %v1647
          %v1652 = vrot.slane %v1634, 7
          %v1653 = vsel %vm638, %v1652, %v1633
          %v1654 = vsel %vm408, %v1653, 0
          %1656 = vmatprep.subr.mxu0 0.0
          %1657 = vmatpush1.msra.mxu0 %v1635
          %1658 = vmatprep.subr.mxu0 0.0
          %1659 = vmatpush1.msra.mxu0 %v1636
          %1660 = vmatprep.subr.mxu0 0.0
          %1661 = vmatpush1.msra.mxu0 %v1637
          %1662 = vmatprep.subr.mxu0 0.0
          %1663 = vmatpush1.msra.mxu0 %v1638
          %1664 = vmatprep.subr.mxu0 0.0
          %1665 = vmatpush1.msra.mxu0 %v1639
          %1666 = vmatprep.subr.mxu0 0.0
          %1667 = vmatpush1.msra.mxu0 %v1640
          %1668 = vmatprep.subr.mxu0 0.0
          %1669 = vmatpush1.msra.mxu0 %v1641
          %1670 = vmatprep.subr.mxu0 0.0
          %1671 = vmatpush1.msra.mxu0 %v1642
          %1672 = vmatprep.subr.mxu0 0.0
          %1673 = vmatpush1.msra.mxu0 0.0
          %1674 = vmatprep.subr.mxu0 0.0
          %1675 = vmatpush1.msra.mxu0 0.0
          %1676 = vmatprep.subr.mxu0 0.0
          %1677 = vmatpush1.msra.mxu0 0.0
          %1678 = vmatprep.subr.mxu0 0.0
          %1679 = vmatpush1.msra.mxu0 0.0
          %1680 = vmatprep.subr.mxu0 0.0
          %1681 = vmatpush1.msra.mxu0 0.0
          %1682 = vmatprep.subr.mxu0 0.0
          %1683 = vmatpush1.msra.mxu0 0.0
          %1684 = vmatprep.subr.mxu0 0.0
          %1685 = vmatpush1.msra.mxu0 0.0
          %1686 = vmatprep.subr.mxu0 0.0
          %1687 = vmatpush1.msra.mxu0 0.0
          %1688 = vmatprep.subr.mxu0 0.0
          %1689 = vmatpush1.msra.mxu0 0.0
          %1690 = vmatprep.subr.mxu0 0.0
          %1691 = vmatpush1.msra.mxu0 0.0
          %1692 = vmatprep.subr.mxu0 0.0
          %1693 = vmatpush1.msra.mxu0 0.0
          %1694 = vmatprep.subr.mxu0 0.0
          %1695 = vmatpush1.msra.mxu0 0.0
          %1696 = vmatprep.subr.mxu0 0.0
          %1697 = vmatpush1.msra.mxu0 0.0
          %1698 = vmatprep.subr.mxu0 0.0
          %1699 = vmatpush1.msra.mxu0 0.0
          %1700 = vmatprep.subr.mxu0 0.0
          %1701 = vmatpush1.msra.mxu0 0.0
          %1702 = vmatprep.subr.mxu0 0.0
          %1703 = vmatpush1.msra.mxu0 0.0
          %1704 = vmatprep.subr.mxu0 0.0
          %1705 = vmatpush1.msra.mxu0 0.0
          %1706 = vmatprep.subr.mxu0 0.0
          %1707 = vmatpush1.msra.mxu0 0.0
          %1708 = vmatprep.subr.mxu0 0.0
          %1709 = vmatpush1.msra.mxu0 0.0
          %1710 = vmatprep.subr.mxu0 0.0
          %1711 = vmatpush1.msra.mxu0 0.0
          %1712 = vmatprep.subr.mxu0 0.0
          %1713 = vmatpush1.msra.mxu0 0.0
          %1714 = vmatprep.subr.mxu0 0.0
          %1715 = vmatpush1.msra.mxu0 0.0
          %1716 = vmatprep.subr.mxu0 0.0
          %1717 = vmatpush1.msra.mxu0 0.0
          %1718 = vmatprep.subr.mxu0 0.0
          %1719 = vmatpush1.msra.mxu0 0.0
          %1720 = vmatprep.mubr.f32.mxu0 0.0
          %1721 = vmatmul.mubr.f32.gmra.mrb[0].mxu0 %v1654
          %v1722 = vpop.f32.mrb[0].mxu0
          %v1723 = vadd.f32 %v1648, %v1722
          %v1724 = vpop.f32.mrb[0].mxu0
          %1725 = vdwg.mxu0
          %v1726 = vxor.u32 %v1723, 2147483648
          %v1727 = vmul.f32 %v1726, 1.442695
          %v1728 = vpow.pop %v1727
          %v1729 = vadd.f32 %v1728, 1.0
          %v1730 = vrcp.pop %v1729
          %v1731 = vmul.f32 1.0, %v1730
          %v1732 = vtanh.pop %v1723
          %1734 = vrot.lane.b32.xlu0 %v1732, 64
          %v1735 = vpop.permute.xlu0 %1734
          %v1737 = vmul.f32 %v1731, %v1735
          %v1738 = vtanh.pop %v1737
          %1740 = vrot.lane.b32.xlu0 %v1738, 96
          %v1741 = vpop.permute.xlu0 %1740
          %v1743 = vmul.f32 %v1731, %v1741
          %1745 = vrot.lane.b32.xlu0 %v1743, 32
          %v1746 = vpop.permute.xlu0 %1745
          %1748 = vrot.lane.b32.xlu0 %v1615, 64
          %v1749 = vpop.permute.xlu0 %1748
          %v1751 = vsel %vm496, %v1746, %v1749
          %v1752 = vld [vmem:[%s6] sm:$0xff]
          %v1753 = vld [vmem:[%s6 + $0x8] sm:$0xff]
          %v1754 = vld [vmem:[%s6 + $0x10] sm:$0xff]
          %v1755 = vld [vmem:[%s6 + $0x18] sm:$0xff]
          %v1756 = vld [vmem:[%s6 + $0x20] sm:$0xff]
          %v1757 = vld [vmem:[%s6 + $0x28] sm:$0xff]
          %v1758 = vld [vmem:[%s6 + $0x30] sm:$0xff]
          %v1759 = vld [vmem:[%s6 + $0x38] sm:$0xff]
          %v1760 = vld [vmem:[%s7] sm:$0x1]
          %v1762 = vlaneseq
          %v1763 = vshrl.u32 %v1762, 7
          %v1764 = vsub.s32 0, %v1763
          %v1765 = vrot.slane %v1760, %v1764
          %v1768 = vsel %vm408, %v1751, 0
          %1770 = vmatprep.subr.mxu0 0.0
          %1771 = vmatpush1.msra.mxu0 %v1752
          %1772 = vmatprep.subr.mxu0 0.0
          %1773 = vmatpush1.msra.mxu0 %v1753
          %1774 = vmatprep.subr.mxu0 0.0
          %1775 = vmatpush1.msra.mxu0 %v1754
          %1776 = vmatprep.subr.mxu0 0.0
          %1777 = vmatpush1.msra.mxu0 %v1755
          %1778 = vmatprep.subr.mxu0 0.0
          %1779 = vmatpush1.msra.mxu0 %v1756
          %1780 = vmatprep.subr.mxu0 0.0
          %1781 = vmatpush1.msra.mxu0 %v1757
          %1782 = vmatprep.subr.mxu0 0.0
          %1783 = vmatpush1.msra.mxu0 %v1758
          %1784 = vmatprep.subr.mxu0 0.0
          %1785 = vmatpush1.msra.mxu0 %v1759
          %1786 = vmatprep.subr.mxu0 0.0
          %1787 = vmatpush1.msra.mxu0 0.0
          %1788 = vmatprep.subr.mxu0 0.0
          %1789 = vmatpush1.msra.mxu0 0.0
          %1790 = vmatprep.subr.mxu0 0.0
          %1791 = vmatpush1.msra.mxu0 0.0
          %1792 = vmatprep.subr.mxu0 0.0
          %1793 = vmatpush1.msra.mxu0 0.0
          %1794 = vmatprep.subr.mxu0 0.0
          %1795 = vmatpush1.msra.mxu0 0.0
          %1796 = vmatprep.subr.mxu0 0.0
          %1797 = vmatpush1.msra.mxu0 0.0
          %1798 = vmatprep.subr.mxu0 0.0
          %1799 = vmatpush1.msra.mxu0 0.0
          %1800 = vmatprep.subr.mxu0 0.0
          %1801 = vmatpush1.msra.mxu0 0.0
          %1802 = vmatprep.subr.mxu0 0.0
          %1803 = vmatpush1.msra.mxu0 0.0
          %1804 = vmatprep.subr.mxu0 0.0
          %1805 = vmatpush1.msra.mxu0 0.0
          %1806 = vmatprep.subr.mxu0 0.0
          %1807 = vmatpush1.msra.mxu0 0.0
          %1808 = vmatprep.subr.mxu0 0.0
          %1809 = vmatpush1.msra.mxu0 0.0
          %1810 = vmatprep.subr.mxu0 0.0
          %1811 = vmatpush1.msra.mxu0 0.0
          %1812 = vmatprep.subr.mxu0 0.0
          %1813 = vmatpush1.msra.mxu0 0.0
          %1814 = vmatprep.subr.mxu0 0.0
          %1815 = vmatpush1.msra.mxu0 0.0
          %1816 = vmatprep.subr.mxu0 0.0
          %1817 = vmatpush1.msra.mxu0 0.0
          %1818 = vmatprep.subr.mxu0 0.0
          %1819 = vmatpush1.msra.mxu0 0.0
          %1820 = vmatprep.subr.mxu0 0.0
          %1821 = vmatpush1.msra.mxu0 0.0
          %1822 = vmatprep.subr.mxu0 0.0
          %1823 = vmatpush1.msra.mxu0 0.0
          %1824 = vmatprep.subr.mxu0 0.0
          %1825 = vmatpush1.msra.mxu0 0.0
          %1826 = vmatprep.subr.mxu0 0.0
          %1827 = vmatpush1.msra.mxu0 0.0
          %1828 = vmatprep.subr.mxu0 0.0
          %1829 = vmatpush1.msra.mxu0 0.0
          %1830 = vmatprep.subr.mxu0 0.0
          %1831 = vmatpush1.msra.mxu0 0.0
          %1832 = vmatprep.subr.mxu0 0.0
          %1833 = vmatpush1.msra.mxu0 0.0
          %1834 = vmatprep.mubr.f32.mxu0 0.0
          %1835 = vmatmul.mubr.f32.gmra.mrb[0].mxu0 %v1768
          %v1836 = vpop.f32.mrb[0].mxu0
          %v1837 = vadd.f32 %v1765, %v1836
          %v1838 = vpop.f32.mrb[0].mxu0
          %1839 = vdwg.mxu0
          %v1840 = vld [vmem:[%s8] sm:$0xff]
          %v1841 = vld [vmem:[%s8 + $0x8] sm:$0xff]
          %v1842 = vld [vmem:[%s8 + $0x10] sm:$0xff]
          %v1843 = vld [vmem:[%s8 + $0x18] sm:$0xff]
          %v1844 = vld [vmem:[%s8 + $0x20] sm:$0xff]
          %v1845 = vld [vmem:[%s8 + $0x28] sm:$0xff]
          %v1846 = vld [vmem:[%s8 + $0x30] sm:$0xff]
          %v1847 = vld [vmem:[%s8 + $0x38] sm:$0xff]
          %v1848 = vld [vmem:[%s8 + $0x40] sm:$0xff]
          %v1849 = vld [vmem:[%s8 + $0x48] sm:$0xff]
          %v1850 = vld [vmem:[%s8 + $0x50] sm:$0xff]
          %v1851 = vld [vmem:[%s8 + $0x58] sm:$0xff]
          %v1852 = vld [vmem:[%s8 + $0x60] sm:$0xff]
          %v1853 = vld [vmem:[%s8 + $0x68] sm:$0xff]
          %v1854 = vld [vmem:[%s8 + $0x70] sm:$0xff]
          %v1855 = vld [vmem:[%s8 + $0x78] sm:$0xff]
          %v1856 = vld [vmem:[%s9] sm:$0x1]
          %v1858 = vlaneseq
          %v1859 = vshrl.u32 %v1858, 7
          %v1860 = vsub.s32 0, %v1859
          %v1861 = vrot.slane %v1856, %v1860
          %1863 = vmatprep.subr.mxu0 0.0
          %1864 = vmatpush1.msra.mxu0 %v1840
          %1865 = vmatprep.subr.mxu0 0.0
          %1866 = vmatpush1.msra.mxu0 %v1841
          %1867 = vmatprep.subr.mxu0 0.0
          %1868 = vmatpush1.msra.mxu0 %v1842
          %1869 = vmatprep.subr.mxu0 0.0
          %1870 = vmatpush1.msra.mxu0 %v1843
          %1871 = vmatprep.subr.mxu0 0.0
          %1872 = vmatpush1.msra.mxu0 %v1844
          %1873 = vmatprep.subr.mxu0 0.0
          %1874 = vmatpush1.msra.mxu0 %v1845
          %1875 = vmatprep.subr.mxu0 0.0
          %1876 = vmatpush1.msra.mxu0 %v1846
          %1877 = vmatprep.subr.mxu0 0.0
          %1878 = vmatpush1.msra.mxu0 %v1847
          %1879 = vmatprep.subr.mxu0 0.0
          %1880 = vmatpush1.msra.mxu0 %v1848
          %1881 = vmatprep.subr.mxu0 0.0
          %1882 = vmatpush1.msra.mxu0 %v1849
          %1883 = vmatprep.subr.mxu0 0.0
          %1884 = vmatpush1.msra.mxu0 %v1850
          %1885 = vmatprep.subr.mxu0 0.0
          %1886 = vmatpush1.msra.mxu0 %v1851
          %1887 = vmatprep.subr.mxu0 0.0
          %1888 = vmatpush1.msra.mxu0 %v1852
          %1889 = vmatprep.subr.mxu0 0.0
          %1890 = vmatpush1.msra.mxu0 %v1853
          %1891 = vmatprep.subr.mxu0 0.0
          %1892 = vmatpush1.msra.mxu0 %v1854
          %1893 = vmatprep.subr.mxu0 0.0
          %1894 = vmatpush1.msra.mxu0 %v1855
          %1895 = vmatprep.subr.mxu0 0.0
          %1896 = vmatpush1.msra.mxu0 0.0
          %1897 = vmatprep.subr.mxu0 0.0
          %1898 = vmatpush1.msra.mxu0 0.0
          %1899 = vmatprep.subr.mxu0 0.0
          %1900 = vmatpush1.msra.mxu0 0.0
          %1901 = vmatprep.subr.mxu0 0.0
          %1902 = vmatpush1.msra.mxu0 0.0
          %1903 = vmatprep.subr.mxu0 0.0
          %1904 = vmatpush1.msra.mxu0 0.0
          %1905 = vmatprep.subr.mxu0 0.0
          %1906 = vmatpush1.msra.mxu0 0.0
          %1907 = vmatprep.subr.mxu0 0.0
          %1908 = vmatpush1.msra.mxu0 0.0
          %1909 = vmatprep.subr.mxu0 0.0
          %1910 = vmatpush1.msra.mxu0 0.0
          %1911 = vmatprep.subr.mxu0 0.0
          %1912 = vmatpush1.msra.mxu0 0.0
          %1913 = vmatprep.subr.mxu0 0.0
          %1914 = vmatpush1.msra.mxu0 0.0
          %1915 = vmatprep.subr.mxu0 0.0
          %1916 = vmatpush1.msra.mxu0 0.0
          %1917 = vmatprep.subr.mxu0 0.0
          %1918 = vmatpush1.msra.mxu0 0.0
          %1919 = vmatprep.subr.mxu0 0.0
          %1920 = vmatpush1.msra.mxu0 0.0
          %1921 = vmatprep.subr.mxu0 0.0
          %1922 = vmatpush1.msra.mxu0 0.0
          %1923 = vmatprep.subr.mxu0 0.0
          %1924 = vmatpush1.msra.mxu0 0.0
          %1925 = vmatprep.subr.mxu0 0.0
          %1926 = vmatpush1.msra.mxu0 0.0
          %1927 = vmatprep.mubr.f32.mxu0 0.0
          %1928 = vmatmul.mubr.f32.gmra.mrb[0].mxu0 %v1837
          %v1929 = vpop.f32.mrb[0].mxu0
          %v1930 = vadd.f32 %v1861, %v1929
          %v1931 = vpop.f32.mrb[0].mxu0
          %1932 = vdwg.mxu0
          %vm1933 = vcmask 17408
          %1934 = vst.msk [vmem:[#allocation9] sm:$0x3] %vm1933, %v1930
        $region76: #{bilstm_head.1} parent=59 // pred_fallthru
          _
        // Predicated region
        $region77: #{bilstm_head.1} parent=59 // pred_check
          %p1935 = pneg %p256
        $region78: #{bilstm_head.1} parent=59 // pred_check_branch
          %1937 = sbr.rel (%p1935) target = $region80
        $region79: #{bilstm_head.1} parent=59 // pred_region
          %s1939 = ssub.s32 32, 32
          %1940 = vsyncadd [#allocation6], %s1939
          %s1942 = sshll.u32 [#allocation9], 4
          %s1943 = int_to_ptr.vmem [resolvable:$true] %s1942
          %1945 = dma.vmem_to_hbm [thread:$0]  %s1943, 32, %s10, [#allocation6]
        $region80: #{bilstm_head.1} parent=59 // pred_fallthru
          _
        // Predicated region
        $region81: #{bilstm_head.1} parent=59 // pred_check
          %p1946 = pneg %p256
        $region82: #{bilstm_head.1} parent=59 // pred_check_branch
          %1948 = sbr.rel (%p1946) target = $region84
        $region83: #{bilstm_head.1} parent=59 // pred_region
          %1949 = dma.done [#allocation6], 32
        $region84: #{bilstm_head.1} parent=59 // pred_fallthru
          _
      $region60: #{bilstm_head.1} parent=5 // pred_fallthru
        _
      %p1950 = scmp.le.s32.totalorder 2, %s21
      // Predicated region
      $region85: #{bilstm_head.1} parent=5 // pred_check
        %p1951 = pneg %p1950
      $region86: #{bilstm_head.1} parent=5 // pred_check_branch
        %1953 = sbr.rel (%p1951) target = $region88
      $region87: #{bilstm_head.1} parent=5 // pred_region
        %s1954 = ssub.s32 %s21, 2
      $region88: #{bilstm_head.1} parent=5 // pred_fallthru
        _
    $region6: #{bilstm_head.1} parent=1 // loop_footer
      %s25 = sadd.s32 1, %s21
    $region7: #{bilstm_head.1} parent=1 // loop_footer_branch
      %20 = sbr.rel target = $region3
    $region8: #{bilstm_head.1} parent=1 // loop_exit
      _
    %1955 = vsyncpa [#allocation5], 1
    %s1956 = scalar_lea.sflag [#allocation5], 1
    %1957 = vsyncpa %s1956, 1
    %1958 = vsyncpa [#allocation8], 1
    %1959 = vsyncpa [#allocation6], 1
    %s1960 = scalar_lea.sflag [#allocation6], 1
    %1961 = vsyncpa %s1960, 1

</llo_original>
